<compile_context>
chip_gen: v6e
topology: v6e:2x2x1
jax: 0.10.0
libtpu: 0.0.40
codegen_flags: <defaults>
</compile_context>

<pallas_src>
import functools

import jax
import jax.numpy as jnp
from jax.experimental import pallas as pl
from jax.experimental.pallas import tpu as pltpu


def se_gate_conv1x1_kernel(gate_ref, w_ref, x_ref, o_ref, *, mxu_dtype):
    # gate_ref: (1, Cin)     per-channel pre-sigmoid gate
    # w_ref:    (Cout, Cin)  1x1 conv weight (PyTorch OI layout, 1x1 dims dropped)
    # x_ref:    (Cin, HW)    activations, NCHW-native flat view
    # o_ref:    (Cout, HW)
    s = jax.nn.sigmoid(gate_ref[...].astype(jnp.float32))          # (1, Cin)    -> EUP
    w_scaled = w_ref[...].astype(jnp.float32) * s                  # (Cout, Cin) -> VPU (small)
    x = x_ref[...]
    if mxu_dtype is not None:
        # Single-pass MXU (bf16 operands), f32 accumulate. Big win on v5e; harmless elsewhere.
        w_scaled = w_scaled.astype(mxu_dtype)
        x = x.astype(mxu_dtype)
    o_ref[...] = jnp.dot(                                          # (Cout, HW)  -> MXU
        w_scaled, x, preferred_element_type=jnp.float32
    ).astype(o_ref.dtype)


def se_gate_conv1x1(x_nchw, gate_nc11, weight_oi11, *, out_dtype=None, mxu_dtype=None):
    """conv1x1(x * sigmoid(gate)) matching the PyTorch module (N == 1).

    out_dtype:  dtype of the stored output (default: x dtype). Use bf16 to halve the
                output HBM write when the consumer accepts bf16.
    mxu_dtype:  optional in-kernel operand cast for the matmul (e.g. jnp.bfloat16 on v5e,
                or whenever x already arrives in bf16). None = exact f32 path.
    """
    N, C, H, W = x_nchw.shape
    Cout = weight_oi11.shape[0]
    assert N == 1, "module spec has batch size 1"

    # All layout glue below is FREE (pure reshapes, no data movement).
    x2d = x_nchw.reshape(C, H * W)            # (Cin, HW)
    gate2d = gate_nc11.reshape(1, C)          # (1, Cin)
    w2d = weight_oi11.reshape(Cout, C)        # (Cout, Cin)

    if out_dtype is None:
        out_dtype = x2d.dtype

    HW = H * W
    flops = 2 * Cout * C * HW
    bytes_accessed = (
        x2d.dtype.itemsize * C * HW
        + w2d.dtype.itemsize * Cout * C
        + gate2d.dtype.itemsize * C
        + jnp.dtype(out_dtype).itemsize * Cout * HW
    )

    kernel = functools.partial(se_gate_conv1x1_kernel, mxu_dtype=mxu_dtype)

    out2d = pl.pallas_call(
        kernel,
        out_shape=jax.ShapeDtypeStruct((Cout, HW), out_dtype),
        in_specs=[
            pl.BlockSpec(memory_space=pltpu.MemorySpace.VMEM),
            pl.BlockSpec(memory_space=pltpu.MemorySpace.VMEM),
            pl.BlockSpec(memory_space=pltpu.MemorySpace.VMEM),
        ],
        out_specs=pl.BlockSpec(memory_space=pltpu.MemorySpace.VMEM),
        cost_estimate=pl.CostEstimate(
            flops=flops, transcendentals=C, bytes_accessed=bytes_accessed
        ),
    )(gate2d, w2d, x2d)

    return out2d.reshape(N, Cout, H, W)       # free reshape back to NCHW


if __name__ == "__main__":
    key = jax.random.PRNGKey(0)
    k1, k2, k3 = jax.random.split(key, 3)

    # Shapes implied by the module (small enough to run directly).
    N, Cin, H, W, Cout = 1, 480, 28, 28, 80
    x208 = jax.random.normal(k1, (N, Cin, H, W), dtype=jnp.float32)   # input feature map
    x212 = jax.random.normal(k2, (N, Cin, 1, 1), dtype=jnp.float32)   # SE gate
    # Deterministic Conv2d(480, 80, 1x1, bias=False) weight.
    weight = jax.random.normal(k3, (Cout, Cin, 1, 1), dtype=jnp.float32) * 0.02

    # Pure-JAX reference for correctness.
    gated = x208 * jax.nn.sigmoid(x212)
    ref = jnp.einsum("nchw,oc->nohw", gated, weight[:, :, 0, 0])

    # 1) Exact f32 path (matches the PyTorch module semantics).
    out = se_gate_conv1x1(x208, x212, weight)
    out = jax.block_until_ready(out)
    assert out.shape == (N, Cout, H, W), out.shape
    assert jnp.allclose(out, ref, atol=1e-3, rtol=1e-3), float(
        jnp.max(jnp.abs(out - ref))
    )

    # 2) Reduced-HBM path: bf16 activations from the producer + bf16 output + bf16 MXU
    #    operands (f32 accumulate). Validate against the f32 reference with bf16 tolerance.
    out_bf16 = se_gate_conv1x1(
        x208.astype(jnp.bfloat16),
        x212,
        weight,
        out_dtype=jnp.bfloat16,
        mxu_dtype=jnp.bfloat16,
    )
    out_bf16 = jax.block_until_ready(out_bf16)
    assert out_bf16.dtype == jnp.bfloat16
    assert jnp.allclose(
        out_bf16.astype(jnp.float32), ref, atol=3e-2, rtol=3e-2
    ), float(jnp.max(jnp.abs(out_bf16.astype(jnp.float32) - ref)))

    print("KERNEL_OK")
</pallas_src>

<mosaic_0001>
module attributes {stable_mosaic.version = 11 : i64} {
  func.func @se_gate_conv1x1_kernel(%arg0: memref<1x480xf32, #tpu.memory_space<vmem>>, %arg1: memref<80x480xf32, #tpu.memory_space<vmem>>, %arg2: memref<480x784xf32, #tpu.memory_space<vmem>>, %arg3: memref<80x784xf32, #tpu.memory_space<vmem>>) attributes {dimension_semantics = [], scalar_prefetch = 0 : i64, scratch_operands = 0 : i64, tpu.core_type = #tpu.core_type<tc>} {
    %c0 = arith.constant 0 : index
    %c0_0 = arith.constant 0 : index
    %0 = vector.load %arg0[%c0, %c0_0] : memref<1x480xf32, #tpu.memory_space<vmem>>, vector<1x480xf32>
    %1 = arith.negf %0 : vector<1x480xf32>
    %2 = math.exp %1 : vector<1x480xf32>
    %cst = arith.constant 1.000000e+00 : f32
    %3 = vector.broadcast %cst : f32 to vector<1x480xf32>
    %4 = arith.addf %3, %2 : vector<1x480xf32>
    %5 = arith.divf %3, %4 : vector<1x480xf32>
    %c0_1 = arith.constant 0 : index
    %c0_2 = arith.constant 0 : index
    %6 = vector.load %arg1[%c0_1, %c0_2] : memref<80x480xf32, #tpu.memory_space<vmem>>, vector<80x480xf32>
    %7 = vector.broadcast %5 : vector<1x480xf32> to vector<80x480xf32>
    %8 = arith.mulf %6, %7 : vector<80x480xf32>
    %c0_3 = arith.constant 0 : index
    %c0_4 = arith.constant 0 : index
    %9 = vector.load %arg2[%c0_3, %c0_4] : memref<480x784xf32, #tpu.memory_space<vmem>>, vector<480x784xf32>
    %cst_5 = arith.constant dense<0.000000e+00> : vector<80x784xf32>
    %10 = tpu.matmul %8, %9, %cst_5 {dimension_numbers = #tpu.dot_dimension_numbers<[1], [0], [0], [1], [0, 0, 1, 1], [], []>} : vector<80x480xf32>, vector<480x784xf32>, vector<80x784xf32> -> vector<80x784xf32>
    %c0_6 = arith.constant 0 : index
    %c0_7 = arith.constant 0 : index
    %11 = vector.load %arg3[%c0_6, %c0_7] : memref<80x784xf32, #tpu.memory_space<vmem>>, vector<80x784xf32>
    tpu.vector_store %arg3[%c0_6, %c0_7], %10 {strides = array<i32>} : memref<80x784xf32, #tpu.memory_space<vmem>>, vector<80x784xf32>,
    return
  }
}

</mosaic_0001>

<llo_original>
// kernel: tpu_custom_call.1
$region0: #{tpu_custom_call.1}
  #allocation0 [shape = 'u32[]', space=smem, size = 0x4, offset = 0x4, fixed_abs, tag = 'smem constant byte address 0x4 - core index']
  #allocation1 [shape = 'u32[144,128]{1,0:T(1,128)}', space=vmem, size = 0x12000, scoped, tag = 'internal scratch']
  %s0 = inlined_call_operand.vmem [shape: f32[1,480], index: 0, kind: input, shape index: {}]
  %s1 = inlined_call_operand.vmem [shape: f32[80,480], index: 1, kind: input, shape index: {}]
  %s2 = inlined_call_operand.vmem [shape: f32[480,784], index: 2, kind: input, shape index: {}]
  %s3 = inlined_call_operand.hbm [shape: f32[80,784], index: 3, kind: output, shape index: {}]
  %s4 = sld [smem:[#allocation0]]
  $region22: #{tpu_custom_call.1} parent=0
    _
  %s6 = ssub.s32 1, %s4
  %s7 = scalar_select 0, %s6, %s4
  $region1: #{tpu_custom_call.1} parent=0
    #allocation2 [shape = 'u8[286720]{0}', space=vmem, size = 0x46000, scoped, tag = 'output window, operand 0, single buffered']
    #allocation3 [shape = 's32[1]{0}', space=sflag, size = 0x4, scoped, tag = 'scoped memory for tpu_custom_call.1']
    %8 = vsyncpa [#allocation3], 0
    // Predicated region
    $region2: #{tpu_custom_call.1} parent=1 // pred_check
      _
    $region3: #{tpu_custom_call.1} parent=1 // pred_check_branch
      %10 = sbr.rel (0) target = $region5
    $region4: #{tpu_custom_call.1} parent=1 // pred_region
      _
    $region5: #{tpu_custom_call.1} parent=1 // pred_fallthru
      _
    // Predicated region
    $region6: #{tpu_custom_call.1} parent=1 // pred_check
      _
    $region7: #{tpu_custom_call.1} parent=1 // pred_check_branch
      %12 = sbr.rel (0) target = $region9
    $region8: #{tpu_custom_call.1} parent=1 // pred_region
      _
    $region9: #{tpu_custom_call.1} parent=1 // pred_fallthru
      _
    // Predicated region
    $region10: #{tpu_custom_call.1} parent=1 // pred_check
      _
    $region11: #{tpu_custom_call.1} parent=1 // pred_check_branch
      %14 = sbr.rel (0) target = $region13
    $region12: #{tpu_custom_call.1} parent=1 // pred_region
      _
    $region13: #{tpu_custom_call.1} parent=1 // pred_fallthru
      _
    %v15 = vld [vmem:[%s0] sm:$0xf]
    %v16 = vxor.u32 %v15, 2147483648
    %v17 = vmul.f32 %v16, 1.442695
    %v18 = vpow.pop %v17
    %v19 = vadd.f32 %v18, 1.0
    %v20 = vrcp.pop %v19
    %v21 = vmul.f32 1.0, %v20
    %v22 = vld [vmem:[%s1] sm:$0xff]
    %v23 = vld [vmem:[%s1 + $0x8] sm:$0xff]
    %v24 = vld [vmem:[%s1 + $0x10] sm:$0xff]
    %v25 = vld [vmem:[%s1 + $0x18] sm:$0xff]
    %v26 = vld [vmem:[%s1 + $0x20] sm:$0xff]
    %v27 = vld [vmem:[%s1 + $0x28] sm:$0xff]
    %v28 = vld [vmem:[%s1 + $0x30] sm:$0xff]
    %v29 = vld [vmem:[%s1 + $0x38] sm:$0xff]
    %v30 = vld [vmem:[%s1 + $0x40] sm:$0xff]
    %v31 = vld [vmem:[%s1 + $0x48] sm:$0xff]
    %v32 = vld [vmem:[%s1 + $0x50] sm:$0xff]
    %v33 = vld [vmem:[%s1 + $0x58] sm:$0xff]
    %v34 = vld [vmem:[%s1 + $0x60] sm:$0xff]
    %v35 = vld [vmem:[%s1 + $0x68] sm:$0xff]
    %v36 = vld [vmem:[%s1 + $0x70] sm:$0xff]
    %v37 = vld [vmem:[%s1 + $0x78] sm:$0xff]
    %v38 = vld [vmem:[%s1 + $0x80] sm:$0xff]
    %v39 = vld [vmem:[%s1 + $0x88] sm:$0xff]
    %v40 = vld [vmem:[%s1 + $0x90] sm:$0xff]
    %v41 = vld [vmem:[%s1 + $0x98] sm:$0xff]
    %v42 = vld [vmem:[%s1 + $0xa0] sm:$0xff]
    %v43 = vld [vmem:[%s1 + $0xa8] sm:$0xff]
    %v44 = vld [vmem:[%s1 + $0xb0] sm:$0xff]
    %v45 = vld [vmem:[%s1 + $0xb8] sm:$0xff]
    %v46 = vld [vmem:[%s1 + $0xc0] sm:$0xff]
    %v47 = vld [vmem:[%s1 + $0xc8] sm:$0xff]
    %v48 = vld [vmem:[%s1 + $0xd0] sm:$0xff]
    %v49 = vld [vmem:[%s1 + $0xd8] sm:$0xff]
    %v50 = vld [vmem:[%s1 + $0xe0] sm:$0xff]
    %v51 = vld [vmem:[%s1 + $0xe8] sm:$0xff]
    %v52 = vld [vmem:[%s1 + $0xf0] sm:$0xff]
    %v53 = vld [vmem:[%s1 + $0xf8] sm:$0xff]
    %v54 = vld [vmem:[%s1 + $0x100] sm:$0xff]
    %v55 = vld [vmem:[%s1 + $0x108] sm:$0xff]
    %v56 = vld [vmem:[%s1 + $0x110] sm:$0xff]
    %v57 = vld [vmem:[%s1 + $0x118] sm:$0xff]
    %v58 = vld [vmem:[%s1 + $0x120] sm:$0xff]
    %v59 = vld [vmem:[%s1 + $0x128] sm:$0xff]
    %v60 = vld [vmem:[%s1 + $0x130] sm:$0xff]
    %v61 = vld [vmem:[%s1 + $0x138] sm:$0xff]
    %v63 = vlaneseq
    %v64 = vshrl.u32 %v63, 7
    %v65 = vsub.s32 0, %v64
    %v66 = vrot.slane %v21, %v65
    %v67 = vlaneseq
    %v68 = vshrl.u32 %v67, 7
    %v69 = vsub.s32 1, %v68
    %v70 = vrot.slane %v21, %v69
    %v71 = vlaneseq
    %v72 = vshrl.u32 %v71, 7
    %v73 = vsub.s32 2, %v72
    %v74 = vrot.slane %v21, %v73
    %v75 = vlaneseq
    %v76 = vshrl.u32 %v75, 7
    %v77 = vsub.s32 3, %v76
    %v78 = vrot.slane %v21, %v77
    %v83 = vmul.f32 %v22, %v66
    %v84 = vmul.f32 %v23, %v70
    %v85 = vmul.f32 %v24, %v74
    %v86 = vmul.f32 %v25, %v78
    %v87 = vmul.f32 %v26, %v66
    %v88 = vmul.f32 %v27, %v70
    %v89 = vmul.f32 %v28, %v74
    %v90 = vmul.f32 %v29, %v78
    %v91 = vmul.f32 %v30, %v66
    %v92 = vmul.f32 %v31, %v70
    %v93 = vmul.f32 %v32, %v74
    %v94 = vmul.f32 %v33, %v78
    %v95 = vmul.f32 %v34, %v66
    %v96 = vmul.f32 %v35, %v70
    %v97 = vmul.f32 %v36, %v74
    %v98 = vmul.f32 %v37, %v78
    %v99 = vmul.f32 %v38, %v66
    %v100 = vmul.f32 %v39, %v70
    %v101 = vmul.f32 %v40, %v74
    %v102 = vmul.f32 %v41, %v78
    %v103 = vmul.f32 %v42, %v66
    %v104 = vmul.f32 %v43, %v70
    %v105 = vmul.f32 %v44, %v74
    %v106 = vmul.f32 %v45, %v78
    %v107 = vmul.f32 %v46, %v66
    %v108 = vmul.f32 %v47, %v70
    %v109 = vmul.f32 %v48, %v74
    %v110 = vmul.f32 %v49, %v78
    %v111 = vmul.f32 %v50, %v66
    %v112 = vmul.f32 %v51, %v70
    %v113 = vmul.f32 %v52, %v74
    %v114 = vmul.f32 %v53, %v78
    %v115 = vmul.f32 %v54, %v66
    %v116 = vmul.f32 %v55, %v70
    %v117 = vmul.f32 %v56, %v74
    %v118 = vmul.f32 %v57, %v78
    %v119 = vmul.f32 %v58, %v66
    %v120 = vmul.f32 %v59, %v70
    %v121 = vmul.f32 %v60, %v74
    %v122 = vmul.f32 %v61, %v78
    %v123 = vld [vmem:[%s2] sm:$0xff]
    %v124 = vld [vmem:[%s2 + $0x8] sm:$0xff]
    %v125 = vld [vmem:[%s2 + $0x10] sm:$0xff]
    %v126 = vld [vmem:[%s2 + $0x18] sm:$0xff]
    %v127 = vld [vmem:[%s2 + $0x20] sm:$0xff]
    %v128 = vld [vmem:[%s2 + $0x28] sm:$0xff]
    %v129 = vld [vmem:[%s2 + $0x30] sm:$0xff]
    %v130 = vld [vmem:[%s2 + $0x38] sm:$0xff]
    %v131 = vld [vmem:[%s2 + $0x40] sm:$0xff]
    %v132 = vld [vmem:[%s2 + $0x48] sm:$0xff]
    %v133 = vld [vmem:[%s2 + $0x50] sm:$0xff]
    %v134 = vld [vmem:[%s2 + $0x58] sm:$0xff]
    %v135 = vld [vmem:[%s2 + $0x60] sm:$0xff]
    %v136 = vld [vmem:[%s2 + $0x68] sm:$0xff]
    %v137 = vld [vmem:[%s2 + $0x70] sm:$0xff]
    %v138 = vld [vmem:[%s2 + $0x78] sm:$0xff]
    %v139 = vld [vmem:[%s2 + $0x80] sm:$0xff]
    %v140 = vld [vmem:[%s2 + $0x88] sm:$0xff]
    %v141 = vld [vmem:[%s2 + $0x90] sm:$0xff]
    %v142 = vld [vmem:[%s2 + $0x98] sm:$0xff]
    %v143 = vld [vmem:[%s2 + $0xa0] sm:$0xff]
    %v144 = vld [vmem:[%s2 + $0xa8] sm:$0xff]
    %v145 = vld [vmem:[%s2 + $0xb0] sm:$0xff]
    %v146 = vld [vmem:[%s2 + $0xb8] sm:$0xff]
    %v147 = vld [vmem:[%s2 + $0xc0] sm:$0xff]
    %v148 = vld [vmem:[%s2 + $0xc8] sm:$0xff]
    %v149 = vld [vmem:[%s2 + $0xd0] sm:$0xff]
    %v150 = vld [vmem:[%s2 + $0xd8] sm:$0xff]
    %v151 = vld [vmem:[%s2 + $0xe0] sm:$0xff]
    %v152 = vld [vmem:[%s2 + $0xe8] sm:$0xff]
    %v153 = vld [vmem:[%s2 + $0xf0] sm:$0xff]
    %v154 = vld [vmem:[%s2 + $0xf8] sm:$0xff]
    %v155 = vld [vmem:[%s2 + $0x100] sm:$0xff]
    %v156 = vld [vmem:[%s2 + $0x108] sm:$0xff]
    %v157 = vld [vmem:[%s2 + $0x110] sm:$0xff]
    %v158 = vld [vmem:[%s2 + $0x118] sm:$0xff]
    %v159 = vld [vmem:[%s2 + $0x120] sm:$0xff]
    %v160 = vld [vmem:[%s2 + $0x128] sm:$0xff]
    %v161 = vld [vmem:[%s2 + $0x130] sm:$0xff]
    %v162 = vld [vmem:[%s2 + $0x138] sm:$0xff]
    %v163 = vld [vmem:[%s2 + $0x140] sm:$0xff]
    %v164 = vld [vmem:[%s2 + $0x148] sm:$0xff]
    %v165 = vld [vmem:[%s2 + $0x150] sm:$0xff]
    %v166 = vld [vmem:[%s2 + $0x158] sm:$0xff]
    %v167 = vld [vmem:[%s2 + $0x160] sm:$0xff]
    %v168 = vld [vmem:[%s2 + $0x168] sm:$0xff]
    %v169 = vld [vmem:[%s2 + $0x170] sm:$0xff]
    %v170 = vld [vmem:[%s2 + $0x178] sm:$0xff]
    %v171 = vld [vmem:[%s2 + $0x180] sm:$0xff]
    %v172 = vld [vmem:[%s2 + $0x188] sm:$0xff]
    %v173 = vld [vmem:[%s2 + $0x190] sm:$0xff]
    %v174 = vld [vmem:[%s2 + $0x198] sm:$0xff]
    %v175 = vld [vmem:[%s2 + $0x1a0] sm:$0xff]
    %v176 = vld [vmem:[%s2 + $0x1a8] sm:$0xff]
    %v177 = vld [vmem:[%s2 + $0x1b0] sm:$0xff]
    %v178 = vld [vmem:[%s2 + $0x1b8] sm:$0xff]
    %v179 = vld [vmem:[%s2 + $0x1c0] sm:$0xff]
    %v180 = vld [vmem:[%s2 + $0x1c8] sm:$0xff]
    %v181 = vld [vmem:[%s2 + $0x1d0] sm:$0xff]
    %v182 = vld [vmem:[%s2 + $0x1d8] sm:$0xff]
    %v183 = vld [vmem:[%s2 + $0x1e0] sm:$0xff]
    %v184 = vld [vmem:[%s2 + $0x1e8] sm:$0xff]
    %v185 = vld [vmem:[%s2 + $0x1f0] sm:$0xff]
    %v186 = vld [vmem:[%s2 + $0x1f8] sm:$0xff]
    %v187 = vld [vmem:[%s2 + $0x200] sm:$0xff]
    %v188 = vld [vmem:[%s2 + $0x208] sm:$0xff]
    %v189 = vld [vmem:[%s2 + $0x210] sm:$0xff]
    %v190 = vld [vmem:[%s2 + $0x218] sm:$0xff]
    %v191 = vld [vmem:[%s2 + $0x220] sm:$0xff]
    %v192 = vld [vmem:[%s2 + $0x228] sm:$0xff]
    %v193 = vld [vmem:[%s2 + $0x230] sm:$0xff]
    %v194 = vld [vmem:[%s2 + $0x238] sm:$0xff]
    %v195 = vld [vmem:[%s2 + $0x240] sm:$0xff]
    %v196 = vld [vmem:[%s2 + $0x248] sm:$0xff]
    %v197 = vld [vmem:[%s2 + $0x250] sm:$0xff]
    %v198 = vld [vmem:[%s2 + $0x258] sm:$0xff]
    %v199 = vld [vmem:[%s2 + $0x260] sm:$0xff]
    %v200 = vld [vmem:[%s2 + $0x268] sm:$0xff]
    %v201 = vld [vmem:[%s2 + $0x270] sm:$0xff]
    %v202 = vld [vmem:[%s2 + $0x278] sm:$0xff]
    %v203 = vld [vmem:[%s2 + $0x280] sm:$0xff]
    %v204 = vld [vmem:[%s2 + $0x288] sm:$0xff]
    %v205 = vld [vmem:[%s2 + $0x290] sm:$0xff]
    %v206 = vld [vmem:[%s2 + $0x298] sm:$0xff]
    %v207 = vld [vmem:[%s2 + $0x2a0] sm:$0xff]
    %v208 = vld [vmem:[%s2 + $0x2a8] sm:$0xff]
    %v209 = vld [vmem:[%s2 + $0x2b0] sm:$0xff]
    %v210 = vld [vmem:[%s2 + $0x2b8] sm:$0xff]
    %v211 = vld [vmem:[%s2 + $0x2c0] sm:$0xff]
    %v212 = vld [vmem:[%s2 + $0x2c8] sm:$0xff]
    %v213 = vld [vmem:[%s2 + $0x2d0] sm:$0xff]
    %v214 = vld [vmem:[%s2 + $0x2d8] sm:$0xff]
    %v215 = vld [vmem:[%s2 + $0x2e0] sm:$0xff]
    %v216 = vld [vmem:[%s2 + $0x2e8] sm:$0xff]
    %v217 = vld [vmem:[%s2 + $0x2f0] sm:$0xff]
    %v218 = vld [vmem:[%s2 + $0x2f8] sm:$0xff]
    %v219 = vld [vmem:[%s2 + $0x300] sm:$0xff]
    %v220 = vld [vmem:[%s2 + $0x308] sm:$0xff]
    %v221 = vld [vmem:[%s2 + $0x310] sm:$0xff]
    %v222 = vld [vmem:[%s2 + $0x318] sm:$0xff]
    %v223 = vld [vmem:[%s2 + $0x320] sm:$0xff]
    %v224 = vld [vmem:[%s2 + $0x328] sm:$0xff]
    %v225 = vld [vmem:[%s2 + $0x330] sm:$0xff]
    %v226 = vld [vmem:[%s2 + $0x338] sm:$0xff]
    %v227 = vld [vmem:[%s2 + $0x340] sm:$0xff]
    %v228 = vld [vmem:[%s2 + $0x348] sm:$0xff]
    %v229 = vld [vmem:[%s2 + $0x350] sm:$0xff]
    %v230 = vld [vmem:[%s2 + $0x358] sm:$0xff]
    %v231 = vld [vmem:[%s2 + $0x360] sm:$0xff]
    %v232 = vld [vmem:[%s2 + $0x368] sm:$0xff]
    %v233 = vld [vmem:[%s2 + $0x370] sm:$0xff]
    %v234 = vld [vmem:[%s2 + $0x378] sm:$0xff]
    %v235 = vld [vmem:[%s2 + $0x380] sm:$0xff]
    %v236 = vld [vmem:[%s2 + $0x388] sm:$0xff]
    %v237 = vld [vmem:[%s2 + $0x390] sm:$0xff]
    %v238 = vld [vmem:[%s2 + $0x398] sm:$0xff]
    %v239 = vld [vmem:[%s2 + $0x3a0] sm:$0xff]
    %v240 = vld [vmem:[%s2 + $0x3a8] sm:$0xff]
    %v241 = vld [vmem:[%s2 + $0x3b0] sm:$0xff]
    %v242 = vld [vmem:[%s2 + $0x3b8] sm:$0xff]
    %v243 = vld [vmem:[%s2 + $0x3c0] sm:$0xff]
    %v244 = vld [vmem:[%s2 + $0x3c8] sm:$0xff]
    %v245 = vld [vmem:[%s2 + $0x3d0] sm:$0xff]
    %v246 = vld [vmem:[%s2 + $0x3d8] sm:$0xff]
    %v247 = vld [vmem:[%s2 + $0x3e0] sm:$0xff]
    %v248 = vld [vmem:[%s2 + $0x3e8] sm:$0xff]
    %v249 = vld [vmem:[%s2 + $0x3f0] sm:$0xff]
    %v250 = vld [vmem:[%s2 + $0x3f8] sm:$0xff]
    %v251 = vld [vmem:[%s2 + $0x400] sm:$0xff]
    %v252 = vld [vmem:[%s2 + $0x408] sm:$0xff]
    %v253 = vld [vmem:[%s2 + $0x410] sm:$0xff]
    %v254 = vld [vmem:[%s2 + $0x418] sm:$0xff]
    %v255 = vld [vmem:[%s2 + $0x420] sm:$0xff]
    %v256 = vld [vmem:[%s2 + $0x428] sm:$0xff]
    %v257 = vld [vmem:[%s2 + $0x430] sm:$0xff]
    %v258 = vld [vmem:[%s2 + $0x438] sm:$0xff]
    %v259 = vld [vmem:[%s2 + $0x440] sm:$0xff]
    %v260 = vld [vmem:[%s2 + $0x448] sm:$0xff]
    %v261 = vld [vmem:[%s2 + $0x450] sm:$0xff]
    %v262 = vld [vmem:[%s2 + $0x458] sm:$0xff]
    %v263 = vld [vmem:[%s2 + $0x460] sm:$0xff]
    %v264 = vld [vmem:[%s2 + $0x468] sm:$0xff]
    %v265 = vld [vmem:[%s2 + $0x470] sm:$0xff]
    %v266 = vld [vmem:[%s2 + $0x478] sm:$0xff]
    %v267 = vld [vmem:[%s2 + $0x480] sm:$0xff]
    %v268 = vld [vmem:[%s2 + $0x488] sm:$0xff]
    %v269 = vld [vmem:[%s2 + $0x490] sm:$0xff]
    %v270 = vld [vmem:[%s2 + $0x498] sm:$0xff]
    %v271 = vld [vmem:[%s2 + $0x4a0] sm:$0xff]
    %v272 = vld [vmem:[%s2 + $0x4a8] sm:$0xff]
    %v273 = vld [vmem:[%s2 + $0x4b0] sm:$0xff]
    %v274 = vld [vmem:[%s2 + $0x4b8] sm:$0xff]
    %v275 = vld [vmem:[%s2 + $0x4c0] sm:$0xff]
    %v276 = vld [vmem:[%s2 + $0x4c8] sm:$0xff]
    %v277 = vld [vmem:[%s2 + $0x4d0] sm:$0xff]
    %v278 = vld [vmem:[%s2 + $0x4d8] sm:$0xff]
    %v279 = vld [vmem:[%s2 + $0x4e0] sm:$0xff]
    %v280 = vld [vmem:[%s2 + $0x4e8] sm:$0xff]
    %v281 = vld [vmem:[%s2 + $0x4f0] sm:$0xff]
    %v282 = vld [vmem:[%s2 + $0x4f8] sm:$0xff]
    %v283 = vld [vmem:[%s2 + $0x500] sm:$0xff]
    %v284 = vld [vmem:[%s2 + $0x508] sm:$0xff]
    %v285 = vld [vmem:[%s2 + $0x510] sm:$0xff]
    %v286 = vld [vmem:[%s2 + $0x518] sm:$0xff]
    %v287 = vld [vmem:[%s2 + $0x520] sm:$0xff]
    %v288 = vld [vmem:[%s2 + $0x528] sm:$0xff]
    %v289 = vld [vmem:[%s2 + $0x530] sm:$0xff]
    %v290 = vld [vmem:[%s2 + $0x538] sm:$0xff]
    %v291 = vld [vmem:[%s2 + $0x540] sm:$0xff]
    %v292 = vld [vmem:[%s2 + $0x548] sm:$0xff]
    %v293 = vld [vmem:[%s2 + $0x550] sm:$0xff]
    %v294 = vld [vmem:[%s2 + $0x558] sm:$0xff]
    %v295 = vld [vmem:[%s2 + $0x560] sm:$0xff]
    %v296 = vld [vmem:[%s2 + $0x568] sm:$0xff]
    %v297 = vld [vmem:[%s2 + $0x570] sm:$0xff]
    %v298 = vld [vmem:[%s2 + $0x578] sm:$0xff]
    %v299 = vld [vmem:[%s2 + $0x580] sm:$0xff]
    %v300 = vld [vmem:[%s2 + $0x588] sm:$0xff]
    %v301 = vld [vmem:[%s2 + $0x590] sm:$0xff]
    %v302 = vld [vmem:[%s2 + $0x598] sm:$0xff]
    %v303 = vld [vmem:[%s2 + $0x5a0] sm:$0xff]
    %v304 = vld [vmem:[%s2 + $0x5a8] sm:$0xff]
    %v305 = vld [vmem:[%s2 + $0x5b0] sm:$0xff]
    %v306 = vld [vmem:[%s2 + $0x5b8] sm:$0xff]
    %v307 = vld [vmem:[%s2 + $0x5c0] sm:$0xff]
    %v308 = vld [vmem:[%s2 + $0x5c8] sm:$0xff]
    %v309 = vld [vmem:[%s2 + $0x5d0] sm:$0xff]
    %v310 = vld [vmem:[%s2 + $0x5d8] sm:$0xff]
    %v311 = vld [vmem:[%s2 + $0x5e0] sm:$0xff]
    %v312 = vld [vmem:[%s2 + $0x5e8] sm:$0xff]
    %v313 = vld [vmem:[%s2 + $0x5f0] sm:$0xff]
    %v314 = vld [vmem:[%s2 + $0x5f8] sm:$0xff]
    %v315 = vld [vmem:[%s2 + $0x600] sm:$0xff]
    %v316 = vld [vmem:[%s2 + $0x608] sm:$0xff]
    %v317 = vld [vmem:[%s2 + $0x610] sm:$0xff]
    %v318 = vld [vmem:[%s2 + $0x618] sm:$0xff]
    %v319 = vld [vmem:[%s2 + $0x620] sm:$0xff]
    %v320 = vld [vmem:[%s2 + $0x628] sm:$0xff]
    %v321 = vld [vmem:[%s2 + $0x630] sm:$0xff]
    %v322 = vld [vmem:[%s2 + $0x638] sm:$0xff]
    %v323 = vld [vmem:[%s2 + $0x640] sm:$0xff]
    %v324 = vld [vmem:[%s2 + $0x648] sm:$0xff]
    %v325 = vld [vmem:[%s2 + $0x650] sm:$0xff]
    %v326 = vld [vmem:[%s2 + $0x658] sm:$0xff]
    %v327 = vld [vmem:[%s2 + $0x660] sm:$0xff]
    %v328 = vld [vmem:[%s2 + $0x668] sm:$0xff]
    %v329 = vld [vmem:[%s2 + $0x670] sm:$0xff]
    %v330 = vld [vmem:[%s2 + $0x678] sm:$0xff]
    %v331 = vld [vmem:[%s2 + $0x680] sm:$0xff]
    %v332 = vld [vmem:[%s2 + $0x688] sm:$0xff]
    %v333 = vld [vmem:[%s2 + $0x690] sm:$0xff]
    %v334 = vld [vmem:[%s2 + $0x698] sm:$0xff]
    %v335 = vld [vmem:[%s2 + $0x6a0] sm:$0xff]
    %v336 = vld [vmem:[%s2 + $0x6a8] sm:$0xff]
    %v337 = vld [vmem:[%s2 + $0x6b0] sm:$0xff]
    %v338 = vld [vmem:[%s2 + $0x6b8] sm:$0xff]
    %v339 = vld [vmem:[%s2 + $0x6c0] sm:$0xff]
    %v340 = vld [vmem:[%s2 + $0x6c8] sm:$0xff]
    %v341 = vld [vmem:[%s2 + $0x6d0] sm:$0xff]
    %v342 = vld [vmem:[%s2 + $0x6d8] sm:$0xff]
    %v343 = vld [vmem:[%s2 + $0x6e0] sm:$0xff]
    %v344 = vld [vmem:[%s2 + $0x6e8] sm:$0xff]
    %v345 = vld [vmem:[%s2 + $0x6f0] sm:$0xff]
    %v346 = vld [vmem:[%s2 + $0x6f8] sm:$0xff]
    %v347 = vld [vmem:[%s2 + $0x700] sm:$0xff]
    %v348 = vld [vmem:[%s2 + $0x708] sm:$0xff]
    %v349 = vld [vmem:[%s2 + $0x710] sm:$0xff]
    %v350 = vld [vmem:[%s2 + $0x718] sm:$0xff]
    %v351 = vld [vmem:[%s2 + $0x720] sm:$0xff]
    %v352 = vld [vmem:[%s2 + $0x728] sm:$0xff]
    %v353 = vld [vmem:[%s2 + $0x730] sm:$0xff]
    %v354 = vld [vmem:[%s2 + $0x738] sm:$0xff]
    %v355 = vld [vmem:[%s2 + $0x740] sm:$0xff]
    %v356 = vld [vmem:[%s2 + $0x748] sm:$0xff]
    %v357 = vld [vmem:[%s2 + $0x750] sm:$0xff]
    %v358 = vld [vmem:[%s2 + $0x758] sm:$0xff]
    %v359 = vld [vmem:[%s2 + $0x760] sm:$0xff]
    %v360 = vld [vmem:[%s2 + $0x768] sm:$0xff]
    %v361 = vld [vmem:[%s2 + $0x770] sm:$0xff]
    %v362 = vld [vmem:[%s2 + $0x778] sm:$0xff]
    %v363 = vld [vmem:[%s2 + $0x780] sm:$0xff]
    %v364 = vld [vmem:[%s2 + $0x788] sm:$0xff]
    %v365 = vld [vmem:[%s2 + $0x790] sm:$0xff]
    %v366 = vld [vmem:[%s2 + $0x798] sm:$0xff]
    %v367 = vld [vmem:[%s2 + $0x7a0] sm:$0xff]
    %v368 = vld [vmem:[%s2 + $0x7a8] sm:$0xff]
    %v369 = vld [vmem:[%s2 + $0x7b0] sm:$0xff]
    %v370 = vld [vmem:[%s2 + $0x7b8] sm:$0xff]
    %v371 = vld [vmem:[%s2 + $0x7c0] sm:$0xff]
    %v372 = vld [vmem:[%s2 + $0x7c8] sm:$0xff]
    %v373 = vld [vmem:[%s2 + $0x7d0] sm:$0xff]
    %v374 = vld [vmem:[%s2 + $0x7d8] sm:$0xff]
    %v375 = vld [vmem:[%s2 + $0x7e0] sm:$0xff]
    %v376 = vld [vmem:[%s2 + $0x7e8] sm:$0xff]
    %v377 = vld [vmem:[%s2 + $0x7f0] sm:$0xff]
    %v378 = vld [vmem:[%s2 + $0x7f8] sm:$0xff]
    %v379 = vld [vmem:[%s2 + $0x800] sm:$0xff]
    %v380 = vld [vmem:[%s2 + $0x808] sm:$0xff]
    %v381 = vld [vmem:[%s2 + $0x810] sm:$0xff]
    %v382 = vld [vmem:[%s2 + $0x818] sm:$0xff]
    %v383 = vld [vmem:[%s2 + $0x820] sm:$0xff]
    %v384 = vld [vmem:[%s2 + $0x828] sm:$0xff]
    %v385 = vld [vmem:[%s2 + $0x830] sm:$0xff]
    %v386 = vld [vmem:[%s2 + $0x838] sm:$0xff]
    %v387 = vld [vmem:[%s2 + $0x840] sm:$0xff]
    %v388 = vld [vmem:[%s2 + $0x848] sm:$0xff]
    %v389 = vld [vmem:[%s2 + $0x850] sm:$0xff]
    %v390 = vld [vmem:[%s2 + $0x858] sm:$0xff]
    %v391 = vld [vmem:[%s2 + $0x860] sm:$0xff]
    %v392 = vld [vmem:[%s2 + $0x868] sm:$0xff]
    %v393 = vld [vmem:[%s2 + $0x870] sm:$0xff]
    %v394 = vld [vmem:[%s2 + $0x878] sm:$0xff]
    %v395 = vld [vmem:[%s2 + $0x880] sm:$0xff]
    %v396 = vld [vmem:[%s2 + $0x888] sm:$0xff]
    %v397 = vld [vmem:[%s2 + $0x890] sm:$0xff]
    %v398 = vld [vmem:[%s2 + $0x898] sm:$0xff]
    %v399 = vld [vmem:[%s2 + $0x8a0] sm:$0xff]
    %v400 = vld [vmem:[%s2 + $0x8a8] sm:$0xff]
    %v401 = vld [vmem:[%s2 + $0x8b0] sm:$0xff]
    %v402 = vld [vmem:[%s2 + $0x8b8] sm:$0xff]
    %v403 = vld [vmem:[%s2 + $0x8c0] sm:$0xff]
    %v404 = vld [vmem:[%s2 + $0x8c8] sm:$0xff]
    %v405 = vld [vmem:[%s2 + $0x8d0] sm:$0xff]
    %v406 = vld [vmem:[%s2 + $0x8d8] sm:$0xff]
    %v407 = vld [vmem:[%s2 + $0x8e0] sm:$0xff]
    %v408 = vld [vmem:[%s2 + $0x8e8] sm:$0xff]
    %v409 = vld [vmem:[%s2 + $0x8f0] sm:$0xff]
    %v410 = vld [vmem:[%s2 + $0x8f8] sm:$0xff]
    %v411 = vld [vmem:[%s2 + $0x900] sm:$0xff]
    %v412 = vld [vmem:[%s2 + $0x908] sm:$0xff]
    %v413 = vld [vmem:[%s2 + $0x910] sm:$0xff]
    %v414 = vld [vmem:[%s2 + $0x918] sm:$0xff]
    %v415 = vld [vmem:[%s2 + $0x920] sm:$0xff]
    %v416 = vld [vmem:[%s2 + $0x928] sm:$0xff]
    %v417 = vld [vmem:[%s2 + $0x930] sm:$0xff]
    %v418 = vld [vmem:[%s2 + $0x938] sm:$0xff]
    %v419 = vld [vmem:[%s2 + $0x940] sm:$0xff]
    %v420 = vld [vmem:[%s2 + $0x948] sm:$0xff]
    %v421 = vld [vmem:[%s2 + $0x950] sm:$0xff]
    %v422 = vld [vmem:[%s2 + $0x958] sm:$0xff]
    %v423 = vld [vmem:[%s2 + $0x960] sm:$0xff]
    %v424 = vld [vmem:[%s2 + $0x968] sm:$0xff]
    %v425 = vld [vmem:[%s2 + $0x970] sm:$0xff]
    %v426 = vld [vmem:[%s2 + $0x978] sm:$0xff]
    %v427 = vld [vmem:[%s2 + $0x980] sm:$0xff]
    %v428 = vld [vmem:[%s2 + $0x988] sm:$0xff]
    %v429 = vld [vmem:[%s2 + $0x990] sm:$0xff]
    %v430 = vld [vmem:[%s2 + $0x998] sm:$0xff]
    %v431 = vld [vmem:[%s2 + $0x9a0] sm:$0xff]
    %v432 = vld [vmem:[%s2 + $0x9a8] sm:$0xff]
    %v433 = vld [vmem:[%s2 + $0x9b0] sm:$0xff]
    %v434 = vld [vmem:[%s2 + $0x9b8] sm:$0xff]
    %v435 = vld [vmem:[%s2 + $0x9c0] sm:$0xff]
    %v436 = vld [vmem:[%s2 + $0x9c8] sm:$0xff]
    %v437 = vld [vmem:[%s2 + $0x9d0] sm:$0xff]
    %v438 = vld [vmem:[%s2 + $0x9d8] sm:$0xff]
    %v439 = vld [vmem:[%s2 + $0x9e0] sm:$0xff]
    %v440 = vld [vmem:[%s2 + $0x9e8] sm:$0xff]
    %v441 = vld [vmem:[%s2 + $0x9f0] sm:$0xff]
    %v442 = vld [vmem:[%s2 + $0x9f8] sm:$0xff]
    %v443 = vld [vmem:[%s2 + $0xa00] sm:$0xff]
    %v444 = vld [vmem:[%s2 + $0xa08] sm:$0xff]
    %v445 = vld [vmem:[%s2 + $0xa10] sm:$0xff]
    %v446 = vld [vmem:[%s2 + $0xa18] sm:$0xff]
    %v447 = vld [vmem:[%s2 + $0xa20] sm:$0xff]
    %v448 = vld [vmem:[%s2 + $0xa28] sm:$0xff]
    %v449 = vld [vmem:[%s2 + $0xa30] sm:$0xff]
    %v450 = vld [vmem:[%s2 + $0xa38] sm:$0xff]
    %v451 = vld [vmem:[%s2 + $0xa40] sm:$0xff]
    %v452 = vld [vmem:[%s2 + $0xa48] sm:$0xff]
    %v453 = vld [vmem:[%s2 + $0xa50] sm:$0xff]
    %v454 = vld [vmem:[%s2 + $0xa58] sm:$0xff]
    %v455 = vld [vmem:[%s2 + $0xa60] sm:$0xff]
    %v456 = vld [vmem:[%s2 + $0xa68] sm:$0xff]
    %v457 = vld [vmem:[%s2 + $0xa70] sm:$0xff]
    %v458 = vld [vmem:[%s2 + $0xa78] sm:$0xff]
    %v459 = vld [vmem:[%s2 + $0xa80] sm:$0xff]
    %v460 = vld [vmem:[%s2 + $0xa88] sm:$0xff]
    %v461 = vld [vmem:[%s2 + $0xa90] sm:$0xff]
    %v462 = vld [vmem:[%s2 + $0xa98] sm:$0xff]
    %v463 = vld [vmem:[%s2 + $0xaa0] sm:$0xff]
    %v464 = vld [vmem:[%s2 + $0xaa8] sm:$0xff]
    %v465 = vld [vmem:[%s2 + $0xab0] sm:$0xff]
    %v466 = vld [vmem:[%s2 + $0xab8] sm:$0xff]
    %v467 = vld [vmem:[%s2 + $0xac0] sm:$0xff]
    %v468 = vld [vmem:[%s2 + $0xac8] sm:$0xff]
    %v469 = vld [vmem:[%s2 + $0xad0] sm:$0xff]
    %v470 = vld [vmem:[%s2 + $0xad8] sm:$0xff]
    %v471 = vld [vmem:[%s2 + $0xae0] sm:$0xff]
    %v472 = vld [vmem:[%s2 + $0xae8] sm:$0xff]
    %v473 = vld [vmem:[%s2 + $0xaf0] sm:$0xff]
    %v474 = vld [vmem:[%s2 + $0xaf8] sm:$0xff]
    %v475 = vld [vmem:[%s2 + $0xb00] sm:$0xff]
    %v476 = vld [vmem:[%s2 + $0xb08] sm:$0xff]
    %v477 = vld [vmem:[%s2 + $0xb10] sm:$0xff]
    %v478 = vld [vmem:[%s2 + $0xb18] sm:$0xff]
    %v479 = vld [vmem:[%s2 + $0xb20] sm:$0xff]
    %v480 = vld [vmem:[%s2 + $0xb28] sm:$0xff]
    %v481 = vld [vmem:[%s2 + $0xb30] sm:$0xff]
    %v482 = vld [vmem:[%s2 + $0xb38] sm:$0xff]
    %v483 = vld [vmem:[%s2 + $0xb40] sm:$0xff]
    %v484 = vld [vmem:[%s2 + $0xb48] sm:$0xff]
    %v485 = vld [vmem:[%s2 + $0xb50] sm:$0xff]
    %v486 = vld [vmem:[%s2 + $0xb58] sm:$0xff]
    %v487 = vld [vmem:[%s2 + $0xb60] sm:$0xff]
    %v488 = vld [vmem:[%s2 + $0xb68] sm:$0xff]
    %v489 = vld [vmem:[%s2 + $0xb70] sm:$0xff]
    %v490 = vld [vmem:[%s2 + $0xb78] sm:$0xff]
    %v491 = vld [vmem:[%s2 + $0xb80] sm:$0xff]
    %v492 = vld [vmem:[%s2 + $0xb88] sm:$0xff]
    %v493 = vld [vmem:[%s2 + $0xb90] sm:$0xff]
    %v494 = vld [vmem:[%s2 + $0xb98] sm:$0xff]
    %v495 = vld [vmem:[%s2 + $0xba0] sm:$0xff]
    %v496 = vld [vmem:[%s2 + $0xba8] sm:$0xff]
    %v497 = vld [vmem:[%s2 + $0xbb0] sm:$0xff]
    %v498 = vld [vmem:[%s2 + $0xbb8] sm:$0xff]
    %v499 = vld [vmem:[%s2 + $0xbc0] sm:$0xff]
    %v500 = vld [vmem:[%s2 + $0xbc8] sm:$0xff]
    %v501 = vld [vmem:[%s2 + $0xbd0] sm:$0xff]
    %v502 = vld [vmem:[%s2 + $0xbd8] sm:$0xff]
    %v503 = vld [vmem:[%s2 + $0xbe0] sm:$0xff]
    %v504 = vld [vmem:[%s2 + $0xbe8] sm:$0xff]
    %v505 = vld [vmem:[%s2 + $0xbf0] sm:$0xff]
    %v506 = vld [vmem:[%s2 + $0xbf8] sm:$0xff]
    %v507 = vld [vmem:[%s2 + $0xc00] sm:$0xff]
    %v508 = vld [vmem:[%s2 + $0xc08] sm:$0xff]
    %v509 = vld [vmem:[%s2 + $0xc10] sm:$0xff]
    %v510 = vld [vmem:[%s2 + $0xc18] sm:$0xff]
    %v511 = vld [vmem:[%s2 + $0xc20] sm:$0xff]
    %v512 = vld [vmem:[%s2 + $0xc28] sm:$0xff]
    %v513 = vld [vmem:[%s2 + $0xc30] sm:$0xff]
    %v514 = vld [vmem:[%s2 + $0xc38] sm:$0xff]
    %v515 = vld [vmem:[%s2 + $0xc40] sm:$0xff]
    %v516 = vld [vmem:[%s2 + $0xc48] sm:$0xff]
    %v517 = vld [vmem:[%s2 + $0xc50] sm:$0xff]
    %v518 = vld [vmem:[%s2 + $0xc58] sm:$0xff]
    %v519 = vld [vmem:[%s2 + $0xc60] sm:$0xff]
    %v520 = vld [vmem:[%s2 + $0xc68] sm:$0xff]
    %v521 = vld [vmem:[%s2 + $0xc70] sm:$0xff]
    %v522 = vld [vmem:[%s2 + $0xc78] sm:$0xff]
    %v523 = vld [vmem:[%s2 + $0xc80] sm:$0xff]
    %v524 = vld [vmem:[%s2 + $0xc88] sm:$0xff]
    %v525 = vld [vmem:[%s2 + $0xc90] sm:$0xff]
    %v526 = vld [vmem:[%s2 + $0xc98] sm:$0xff]
    %v527 = vld [vmem:[%s2 + $0xca0] sm:$0xff]
    %v528 = vld [vmem:[%s2 + $0xca8] sm:$0xff]
    %v529 = vld [vmem:[%s2 + $0xcb0] sm:$0xff]
    %v530 = vld [vmem:[%s2 + $0xcb8] sm:$0xff]
    %v531 = vld [vmem:[%s2 + $0xcc0] sm:$0xff]
    %v532 = vld [vmem:[%s2 + $0xcc8] sm:$0xff]
    %v533 = vld [vmem:[%s2 + $0xcd0] sm:$0xff]
    %v534 = vld [vmem:[%s2 + $0xcd8] sm:$0xff]
    %v535 = vld [vmem:[%s2 + $0xce0] sm:$0xff]
    %v536 = vld [vmem:[%s2 + $0xce8] sm:$0xff]
    %v537 = vld [vmem:[%s2 + $0xcf0] sm:$0xff]
    %v538 = vld [vmem:[%s2 + $0xcf8] sm:$0xff]
    %v539 = vld [vmem:[%s2 + $0xd00] sm:$0xff]
    %v540 = vld [vmem:[%s2 + $0xd08] sm:$0xff]
    %v541 = vld [vmem:[%s2 + $0xd10] sm:$0xff]
    %v542 = vld [vmem:[%s2 + $0xd18] sm:$0xff]
    %vm543 = vcmask 785408
    %v545 = vsel %vm543, %v86, 0
    %v548 = vsel %vm543, %v90, 0
    %v551 = vsel %vm543, %v94, 0
    %v554 = vsel %vm543, %v98, 0
    %v557 = vsel %vm543, %v102, 0
    %v560 = vsel %vm543, %v106, 0
    %v563 = vsel %vm543, %v110, 0
    %v566 = vsel %vm543, %v114, 0
    %v569 = vsel %vm543, %v118, 0
    %v572 = vsel %vm543, %v122, 0
    %574 = vmatprep.subr.mxu0 %v229
    %575 = vmatpush1.msra.mxu0 %v228
    %576 = vmatprep.subr.mxu0 %v222
    %577 = vmatpush1.msra.mxu0 %v221
    %578 = vmatprep.subr.mxu0 %v215
    %579 = vmatpush1.msra.mxu0 %v214
    %580 = vmatprep.subr.mxu0 %v208
    %581 = vmatpush1.msra.mxu0 %v207
    %582 = vmatprep.subr.mxu0 %v201
    %583 = vmatpush1.msra.mxu0 %v200
    %584 = vmatprep.subr.mxu0 %v194
    %585 = vmatpush1.msra.mxu0 %v193
    %586 = vmatprep.subr.mxu0 %v187
    %587 = vmatpush1.msra.mxu0 %v186
    %588 = vmatprep.subr.mxu0 %v180
    %589 = vmatpush1.msra.mxu0 %v179
    %590 = vmatprep.subr.mxu0 %v173
    %591 = vmatpush1.msra.mxu0 %v172
    %592 = vmatprep.subr.mxu0 %v166
    %593 = vmatpush1.msra.mxu0 %v165
    %594 = vmatprep.subr.mxu0 %v159
    %595 = vmatpush1.msra.mxu0 %v158
    %596 = vmatprep.subr.mxu0 %v152
    %597 = vmatpush1.msra.mxu0 %v151
    %598 = vmatprep.subr.mxu0 %v145
    %599 = vmatpush1.msra.mxu0 %v144
    %600 = vmatprep.subr.mxu0 %v138
    %601 = vmatpush1.msra.mxu0 %v137
    %602 = vmatprep.subr.mxu0 %v131
    %603 = vmatpush1.msra.mxu0 %v130
    %604 = vmatprep.subr.mxu0 %v124
    %605 = vmatpush1.msra.mxu0 %v123
    %606 = vmatprep.subr.mxu0 %v341
    %607 = vmatpush2.msra.mxu0 %v340
    %608 = vmatprep.subr.mxu0 %v334
    %609 = vmatpush2.msra.mxu0 %v333
    %610 = vmatprep.subr.mxu0 %v327
    %611 = vmatpush2.msra.mxu0 %v326
    %612 = vmatprep.subr.mxu0 %v320
    %613 = vmatpush2.msra.mxu0 %v319
    %614 = vmatprep.subr.mxu0 %v313
    %615 = vmatpush2.msra.mxu0 %v312
    %616 = vmatprep.subr.mxu0 %v306
    %617 = vmatpush2.msra.mxu0 %v305
    %618 = vmatprep.subr.mxu0 %v299
    %619 = vmatpush2.msra.mxu0 %v298
    %620 = vmatprep.subr.mxu0 %v292
    %621 = vmatpush2.msra.mxu0 %v291
    %622 = vmatprep.subr.mxu0 %v285
    %623 = vmatpush2.msra.mxu0 %v284
    %624 = vmatprep.subr.mxu0 %v278
    %625 = vmatpush2.msra.mxu0 %v277
    %626 = vmatprep.subr.mxu0 %v271
    %627 = vmatpush2.msra.mxu0 %v270
    %628 = vmatprep.subr.mxu0 %v264
    %629 = vmatpush2.msra.mxu0 %v263
    %630 = vmatprep.subr.mxu0 %v257
    %631 = vmatpush2.msra.mxu0 %v256
    %632 = vmatprep.subr.mxu0 %v250
    %633 = vmatpush2.msra.mxu0 %v249
    %634 = vmatprep.subr.mxu0 %v243
    %635 = vmatpush2.msra.mxu0 %v242
    %636 = vmatprep.subr.mxu0 %v236
    %637 = vmatpush2.msra.mxu0 %v235
    %638 = vmatprep.mubr.f32.mxu0 %v84
    %639 = vmatmul.mubr.f32.gmra.mxu0 %v83
    %v640 = vpop.f32.mrf.mxu0
    %v641 = vadd.f32 0.0, %v640
    %v642 = vpop.f32.mrf.mxu0
    %v643 = vadd.f32 0.0, %v642
    %644 = vmatprep.mubr.f32.mxu0 %v88
    %645 = vmatmul.mubr.f32.gmra.mxu0 %v87
    %v646 = vpop.f32.mrf.mxu0
    %v647 = vadd.f32 0.0, %v646
    %v648 = vpop.f32.mrf.mxu0
    %v649 = vadd.f32 0.0, %v648
    %650 = vmatprep.mubr.f32.mxu0 %v92
    %651 = vmatmul.mubr.f32.gmra.mxu0 %v91
    %v652 = vpop.f32.mrf.mxu0
    %v653 = vadd.f32 0.0, %v652
    %v654 = vpop.f32.mrf.mxu0
    %v655 = vadd.f32 0.0, %v654
    %656 = vmatprep.mubr.f32.mxu0 %v96
    %657 = vmatmul.mubr.f32.gmra.mxu0 %v95
    %v658 = vpop.f32.mrf.mxu0
    %v659 = vadd.f32 0.0, %v658
    %v660 = vpop.f32.mrf.mxu0
    %v661 = vadd.f32 0.0, %v660
    %662 = vmatprep.mubr.f32.mxu0 %v100
    %663 = vmatmul.mubr.f32.gmra.mxu0 %v99
    %v664 = vpop.f32.mrf.mxu0
    %v665 = vadd.f32 0.0, %v664
    %v666 = vpop.f32.mrf.mxu0
    %v667 = vadd.f32 0.0, %v666
    %668 = vmatprep.mubr.f32.mxu0 %v104
    %669 = vmatmul.mubr.f32.gmra.mxu0 %v103
    %v670 = vpop.f32.mrf.mxu0
    %v671 = vadd.f32 0.0, %v670
    %v672 = vpop.f32.mrf.mxu0
    %v673 = vadd.f32 0.0, %v672
    %674 = vmatprep.mubr.f32.mxu0 %v108
    %675 = vmatmul.mubr.f32.gmra.mxu0 %v107
    %v676 = vpop.f32.mrf.mxu0
    %v677 = vadd.f32 0.0, %v676
    %v678 = vpop.f32.mrf.mxu0
    %v679 = vadd.f32 0.0, %v678
    %680 = vmatprep.mubr.f32.mxu0 %v112
    %681 = vmatmul.mubr.f32.gmra.mxu0 %v111
    %v682 = vpop.f32.mrf.mxu0
    %v683 = vadd.f32 0.0, %v682
    %v684 = vpop.f32.mrf.mxu0
    %v685 = vadd.f32 0.0, %v684
    %686 = vmatprep.mubr.f32.mxu0 %v116
    %687 = vmatmul.mubr.f32.gmra.mxu0 %v115
    %v688 = vpop.f32.mrf.mxu0
    %v689 = vadd.f32 0.0, %v688
    %v690 = vpop.f32.mrf.mxu0
    %v691 = vadd.f32 0.0, %v690
    %692 = vmatprep.mubr.f32.mxu0 %v120
    %693 = vmatmul.mubr.f32.gmra.mxu0 %v119
    %v694 = vpop.f32.mrf.mxu0
    %v695 = vadd.f32 0.0, %v694
    %v696 = vpop.f32.mrf.mxu0
    %v697 = vadd.f32 0.0, %v696
    %698 = vdwg.mxu0
    %699 = vmatprep.subr.mxu0 %v453
    %700 = vmatpush1.msra.mxu0 %v452
    %701 = vmatprep.subr.mxu0 %v446
    %702 = vmatpush1.msra.mxu0 %v445
    %703 = vmatprep.subr.mxu0 %v439
    %704 = vmatpush1.msra.mxu0 %v438
    %705 = vmatprep.subr.mxu0 %v432
    %706 = vmatpush1.msra.mxu0 %v431
    %707 = vmatprep.subr.mxu0 %v425
    %708 = vmatpush1.msra.mxu0 %v424
    %709 = vmatprep.subr.mxu0 %v418
    %710 = vmatpush1.msra.mxu0 %v417
    %711 = vmatprep.subr.mxu0 %v411
    %712 = vmatpush1.msra.mxu0 %v410
    %713 = vmatprep.subr.mxu0 %v404
    %714 = vmatpush1.msra.mxu0 %v403
    %715 = vmatprep.subr.mxu0 %v397
    %716 = vmatpush1.msra.mxu0 %v396
    %717 = vmatprep.subr.mxu0 %v390
    %718 = vmatpush1.msra.mxu0 %v389
    %719 = vmatprep.subr.mxu0 %v383
    %720 = vmatpush1.msra.mxu0 %v382
    %721 = vmatprep.subr.mxu0 %v376
    %722 = vmatpush1.msra.mxu0 %v375
    %723 = vmatprep.subr.mxu0 %v369
    %724 = vmatpush1.msra.mxu0 %v368
    %725 = vmatprep.subr.mxu0 %v362
    %726 = vmatpush1.msra.mxu0 %v361
    %727 = vmatprep.subr.mxu0 %v355
    %728 = vmatpush1.msra.mxu0 %v354
    %729 = vmatprep.subr.mxu0 %v348
    %730 = vmatpush1.msra.mxu0 %v347
    %731 = vmatprep.subr.mxu0 0.0
    %732 = vmatpush2.msra.mxu0 0.0
    %733 = vmatprep.subr.mxu0 0.0
    %734 = vmatpush2.msra.mxu0 0.0
    %735 = vmatprep.subr.mxu0 0.0
    %736 = vmatpush2.msra.mxu0 0.0
    %737 = vmatprep.subr.mxu0 0.0
    %738 = vmatpush2.msra.mxu0 0.0
    %739 = vmatprep.subr.mxu0 %v537
    %740 = vmatpush2.msra.mxu0 %v536
    %741 = vmatprep.subr.mxu0 %v530
    %742 = vmatpush2.msra.mxu0 %v529
    %743 = vmatprep.subr.mxu0 %v523
    %744 = vmatpush2.msra.mxu0 %v522
    %745 = vmatprep.subr.mxu0 %v516
    %746 = vmatpush2.msra.mxu0 %v515
    %747 = vmatprep.subr.mxu0 %v509
    %748 = vmatpush2.msra.mxu0 %v508
    %749 = vmatprep.subr.mxu0 %v502
    %750 = vmatpush2.msra.mxu0 %v501
    %751 = vmatprep.subr.mxu0 %v495
    %752 = vmatpush2.msra.mxu0 %v494
    %753 = vmatprep.subr.mxu0 %v488
    %754 = vmatpush2.msra.mxu0 %v487
    %755 = vmatprep.subr.mxu0 %v481
    %756 = vmatpush2.msra.mxu0 %v480
    %757 = vmatprep.subr.mxu0 %v474
    %758 = vmatpush2.msra.mxu0 %v473
    %759 = vmatprep.subr.mxu0 %v467
    %760 = vmatpush2.msra.mxu0 %v466
    %761 = vmatprep.subr.mxu0 %v460
    %762 = vmatpush2.msra.mxu0 %v459
    %763 = vmatprep.mubr.f32.mxu0 %v545
    %764 = vmatmul.mubr.f32.gmra.mxu0 %v85
    %v765 = vpop.f32.mrf.mxu0
    %v766 = vadd.f32 %v641, %v765
    %v767 = vpop.f32.mrf.mxu0
    %v768 = vadd.f32 %v643, %v767
    %769 = vmatprep.mubr.f32.mxu0 %v548
    %770 = vmatmul.mubr.f32.gmra.mxu0 %v89
    %v771 = vpop.f32.mrf.mxu0
    %v772 = vadd.f32 %v647, %v771
    %v773 = vpop.f32.mrf.mxu0
    %v774 = vadd.f32 %v649, %v773
    %775 = vmatprep.mubr.f32.mxu0 %v551
    %776 = vmatmul.mubr.f32.gmra.mxu0 %v93
    %v777 = vpop.f32.mrf.mxu0
    %v778 = vadd.f32 %v653, %v777
    %v779 = vpop.f32.mrf.mxu0
    %v780 = vadd.f32 %v655, %v779
    %781 = vmatprep.mubr.f32.mxu0 %v554
    %782 = vmatmul.mubr.f32.gmra.mxu0 %v97
    %v783 = vpop.f32.mrf.mxu0
    %v784 = vadd.f32 %v659, %v783
    %v785 = vpop.f32.mrf.mxu0
    %v786 = vadd.f32 %v661, %v785
    %787 = vmatprep.mubr.f32.mxu0 %v557
    %788 = vmatmul.mubr.f32.gmra.mxu0 %v101
    %v789 = vpop.f32.mrf.mxu0
    %v790 = vadd.f32 %v665, %v789
    %v791 = vpop.f32.mrf.mxu0
    %v792 = vadd.f32 %v667, %v791
    %793 = vmatprep.mubr.f32.mxu0 %v560
    %794 = vmatmul.mubr.f32.gmra.mxu0 %v105
    %v795 = vpop.f32.mrf.mxu0
    %v796 = vadd.f32 %v671, %v795
    %v797 = vpop.f32.mrf.mxu0
    %v798 = vadd.f32 %v673, %v797
    %799 = vmatprep.mubr.f32.mxu0 %v563
    %800 = vmatmul.mubr.f32.gmra.mxu0 %v109
    %v801 = vpop.f32.mrf.mxu0
    %v802 = vadd.f32 %v677, %v801
    %v803 = vpop.f32.mrf.mxu0
    %v804 = vadd.f32 %v679, %v803
    %805 = vmatprep.mubr.f32.mxu0 %v566
    %806 = vmatmul.mubr.f32.gmra.mxu0 %v113
    %v807 = vpop.f32.mrf.mxu0
    %v808 = vadd.f32 %v683, %v807
    %v809 = vpop.f32.mrf.mxu0
    %v810 = vadd.f32 %v685, %v809
    %811 = vmatprep.mubr.f32.mxu0 %v569
    %812 = vmatmul.mubr.f32.gmra.mxu0 %v117
    %v813 = vpop.f32.mrf.mxu0
    %v814 = vadd.f32 %v689, %v813
    %v815 = vpop.f32.mrf.mxu0
    %v816 = vadd.f32 %v691, %v815
    %817 = vmatprep.mubr.f32.mxu0 %v572
    %818 = vmatmul.mubr.f32.gmra.mxu0 %v121
    %v819 = vpop.f32.mrf.mxu0
    %v820 = vadd.f32 %v695, %v819
    %v821 = vpop.f32.mrf.mxu0
    %v822 = vadd.f32 %v697, %v821
    %823 = vdwg.mxu0
    %824 = vmatprep.subr.mxu0 %v231
    %825 = vmatpush1.msra.mxu0 %v230
    %826 = vmatprep.subr.mxu0 %v224
    %827 = vmatpush1.msra.mxu0 %v223
    %828 = vmatprep.subr.mxu0 %v217
    %829 = vmatpush1.msra.mxu0 %v216
    %830 = vmatprep.subr.mxu0 %v210
    %831 = vmatpush1.msra.mxu0 %v209
    %832 = vmatprep.subr.mxu0 %v203
    %833 = vmatpush1.msra.mxu0 %v202
    %834 = vmatprep.subr.mxu0 %v196
    %835 = vmatpush1.msra.mxu0 %v195
    %836 = vmatprep.subr.mxu0 %v189
    %837 = vmatpush1.msra.mxu0 %v188
    %838 = vmatprep.subr.mxu0 %v182
    %839 = vmatpush1.msra.mxu0 %v181
    %840 = vmatprep.subr.mxu0 %v175
    %841 = vmatpush1.msra.mxu0 %v174
    %842 = vmatprep.subr.mxu0 %v168
    %843 = vmatpush1.msra.mxu0 %v167
    %844 = vmatprep.subr.mxu0 %v161
    %845 = vmatpush1.msra.mxu0 %v160
    %846 = vmatprep.subr.mxu0 %v154
    %847 = vmatpush1.msra.mxu0 %v153
    %848 = vmatprep.subr.mxu0 %v147
    %849 = vmatpush1.msra.mxu0 %v146
    %850 = vmatprep.subr.mxu0 %v140
    %851 = vmatpush1.msra.mxu0 %v139
    %852 = vmatprep.subr.mxu0 %v133
    %853 = vmatpush1.msra.mxu0 %v132
    %854 = vmatprep.subr.mxu0 %v126
    %855 = vmatpush1.msra.mxu0 %v125
    %856 = vmatprep.subr.mxu0 %v343
    %857 = vmatpush2.msra.mxu0 %v342
    %858 = vmatprep.subr.mxu0 %v336
    %859 = vmatpush2.msra.mxu0 %v335
    %860 = vmatprep.subr.mxu0 %v329
    %861 = vmatpush2.msra.mxu0 %v328
    %862 = vmatprep.subr.mxu0 %v322
    %863 = vmatpush2.msra.mxu0 %v321
    %864 = vmatprep.subr.mxu0 %v315
    %865 = vmatpush2.msra.mxu0 %v314
    %866 = vmatprep.subr.mxu0 %v308
    %867 = vmatpush2.msra.mxu0 %v307
    %868 = vmatprep.subr.mxu0 %v301
    %869 = vmatpush2.msra.mxu0 %v300
    %870 = vmatprep.subr.mxu0 %v294
    %871 = vmatpush2.msra.mxu0 %v293
    %872 = vmatprep.subr.mxu0 %v287
    %873 = vmatpush2.msra.mxu0 %v286
    %874 = vmatprep.subr.mxu0 %v280
    %875 = vmatpush2.msra.mxu0 %v279
    %876 = vmatprep.subr.mxu0 %v273
    %877 = vmatpush2.msra.mxu0 %v272
    %878 = vmatprep.subr.mxu0 %v266
    %879 = vmatpush2.msra.mxu0 %v265
    %880 = vmatprep.subr.mxu0 %v259
    %881 = vmatpush2.msra.mxu0 %v258
    %882 = vmatprep.subr.mxu0 %v252
    %883 = vmatpush2.msra.mxu0 %v251
    %884 = vmatprep.subr.mxu0 %v245
    %885 = vmatpush2.msra.mxu0 %v244
    %886 = vmatprep.subr.mxu0 %v238
    %887 = vmatpush2.msra.mxu0 %v237
    %888 = vmatprep.mubr.f32.mxu0 %v84
    %889 = vmatmul.mubr.f32.gmra.mxu0 %v83
    %v890 = vpop.f32.mrf.mxu0
    %v891 = vadd.f32 0.0, %v890
    %v892 = vpop.f32.mrf.mxu0
    %v893 = vadd.f32 0.0, %v892
    %894 = vmatprep.mubr.f32.mxu0 %v88
    %895 = vmatmul.mubr.f32.gmra.mxu0 %v87
    %v896 = vpop.f32.mrf.mxu0
    %v897 = vadd.f32 0.0, %v896
    %v898 = vpop.f32.mrf.mxu0
    %v899 = vadd.f32 0.0, %v898
    %900 = vmatprep.mubr.f32.mxu0 %v92
    %901 = vmatmul.mubr.f32.gmra.mxu0 %v91
    %v902 = vpop.f32.mrf.mxu0
    %v903 = vadd.f32 0.0, %v902
    %v904 = vpop.f32.mrf.mxu0
    %v905 = vadd.f32 0.0, %v904
    %906 = vmatprep.mubr.f32.mxu0 %v96
    %907 = vmatmul.mubr.f32.gmra.mxu0 %v95
    %v908 = vpop.f32.mrf.mxu0
    %v909 = vadd.f32 0.0, %v908
    %v910 = vpop.f32.mrf.mxu0
    %v911 = vadd.f32 0.0, %v910
    %912 = vmatprep.mubr.f32.mxu0 %v100
    %913 = vmatmul.mubr.f32.gmra.mxu0 %v99
    %v914 = vpop.f32.mrf.mxu0
    %v915 = vadd.f32 0.0, %v914
    %v916 = vpop.f32.mrf.mxu0
    %v917 = vadd.f32 0.0, %v916
    %918 = vmatprep.mubr.f32.mxu0 %v104
    %919 = vmatmul.mubr.f32.gmra.mxu0 %v103
    %v920 = vpop.f32.mrf.mxu0
    %v921 = vadd.f32 0.0, %v920
    %v922 = vpop.f32.mrf.mxu0
    %v923 = vadd.f32 0.0, %v922
    %924 = vmatprep.mubr.f32.mxu0 %v108
    %925 = vmatmul.mubr.f32.gmra.mxu0 %v107
    %v926 = vpop.f32.mrf.mxu0
    %v927 = vadd.f32 0.0, %v926
    %v928 = vpop.f32.mrf.mxu0
    %v929 = vadd.f32 0.0, %v928
    %930 = vmatprep.mubr.f32.mxu0 %v112
    %931 = vmatmul.mubr.f32.gmra.mxu0 %v111
    %v932 = vpop.f32.mrf.mxu0
    %v933 = vadd.f32 0.0, %v932
    %v934 = vpop.f32.mrf.mxu0
    %v935 = vadd.f32 0.0, %v934
    %936 = vmatprep.mubr.f32.mxu0 %v116
    %937 = vmatmul.mubr.f32.gmra.mxu0 %v115
    %v938 = vpop.f32.mrf.mxu0
    %v939 = vadd.f32 0.0, %v938
    %v940 = vpop.f32.mrf.mxu0
    %v941 = vadd.f32 0.0, %v940
    %942 = vmatprep.mubr.f32.mxu0 %v120
    %943 = vmatmul.mubr.f32.gmra.mxu0 %v119
    %v944 = vpop.f32.mrf.mxu0
    %v945 = vadd.f32 0.0, %v944
    %v946 = vpop.f32.mrf.mxu0
    %v947 = vadd.f32 0.0, %v946
    %948 = vdwg.mxu0
    %949 = vmatprep.subr.mxu0 %v455
    %950 = vmatpush1.msra.mxu0 %v454
    %951 = vmatprep.subr.mxu0 %v448
    %952 = vmatpush1.msra.mxu0 %v447
    %953 = vmatprep.subr.mxu0 %v441
    %954 = vmatpush1.msra.mxu0 %v440
    %955 = vmatprep.subr.mxu0 %v434
    %956 = vmatpush1.msra.mxu0 %v433
    %957 = vmatprep.subr.mxu0 %v427
    %958 = vmatpush1.msra.mxu0 %v426
    %959 = vmatprep.subr.mxu0 %v420
    %960 = vmatpush1.msra.mxu0 %v419
    %961 = vmatprep.subr.mxu0 %v413
    %962 = vmatpush1.msra.mxu0 %v412
    %963 = vmatprep.subr.mxu0 %v406
    %964 = vmatpush1.msra.mxu0 %v405
    %965 = vmatprep.subr.mxu0 %v399
    %966 = vmatpush1.msra.mxu0 %v398
    %967 = vmatprep.subr.mxu0 %v392
    %968 = vmatpush1.msra.mxu0 %v391
    %969 = vmatprep.subr.mxu0 %v385
    %970 = vmatpush1.msra.mxu0 %v384
    %971 = vmatprep.subr.mxu0 %v378
    %972 = vmatpush1.msra.mxu0 %v377
    %973 = vmatprep.subr.mxu0 %v371
    %974 = vmatpush1.msra.mxu0 %v370
    %975 = vmatprep.subr.mxu0 %v364
    %976 = vmatpush1.msra.mxu0 %v363
    %977 = vmatprep.subr.mxu0 %v357
    %978 = vmatpush1.msra.mxu0 %v356
    %979 = vmatprep.subr.mxu0 %v350
    %980 = vmatpush1.msra.mxu0 %v349
    %981 = vmatprep.subr.mxu0 0.0
    %982 = vmatpush2.msra.mxu0 0.0
    %983 = vmatprep.subr.mxu0 0.0
    %984 = vmatpush2.msra.mxu0 0.0
    %985 = vmatprep.subr.mxu0 0.0
    %986 = vmatpush2.msra.mxu0 0.0
    %987 = vmatprep.subr.mxu0 0.0
    %988 = vmatpush2.msra.mxu0 0.0
    %989 = vmatprep.subr.mxu0 %v539
    %990 = vmatpush2.msra.mxu0 %v538
    %991 = vmatprep.subr.mxu0 %v532
    %992 = vmatpush2.msra.mxu0 %v531
    %993 = vmatprep.subr.mxu0 %v525
    %994 = vmatpush2.msra.mxu0 %v524
    %995 = vmatprep.subr.mxu0 %v518
    %996 = vmatpush2.msra.mxu0 %v517
    %997 = vmatprep.subr.mxu0 %v511
    %998 = vmatpush2.msra.mxu0 %v510
    %999 = vmatprep.subr.mxu0 %v504
    %1000 = vmatpush2.msra.mxu0 %v503
    %1001 = vmatprep.subr.mxu0 %v497
    %1002 = vmatpush2.msra.mxu0 %v496
    %1003 = vmatprep.subr.mxu0 %v490
    %1004 = vmatpush2.msra.mxu0 %v489
    %1005 = vmatprep.subr.mxu0 %v483
    %1006 = vmatpush2.msra.mxu0 %v482
    %1007 = vmatprep.subr.mxu0 %v476
    %1008 = vmatpush2.msra.mxu0 %v475
    %1009 = vmatprep.subr.mxu0 %v469
    %1010 = vmatpush2.msra.mxu0 %v468
    %1011 = vmatprep.subr.mxu0 %v462
    %1012 = vmatpush2.msra.mxu0 %v461
    %1013 = vmatprep.mubr.f32.mxu0 %v545
    %1014 = vmatmul.mubr.f32.gmra.mxu0 %v85
    %v1015 = vpop.f32.mrf.mxu0
    %v1016 = vadd.f32 %v891, %v1015
    %v1017 = vpop.f32.mrf.mxu0
    %v1018 = vadd.f32 %v893, %v1017
    %1019 = vmatprep.mubr.f32.mxu0 %v548
    %1020 = vmatmul.mubr.f32.gmra.mxu0 %v89
    %v1021 = vpop.f32.mrf.mxu0
    %v1022 = vadd.f32 %v897, %v1021
    %v1023 = vpop.f32.mrf.mxu0
    %v1024 = vadd.f32 %v899, %v1023
    %1025 = vmatprep.mubr.f32.mxu0 %v551
    %1026 = vmatmul.mubr.f32.gmra.mxu0 %v93
    %v1027 = vpop.f32.mrf.mxu0
    %v1028 = vadd.f32 %v903, %v1027
    %v1029 = vpop.f32.mrf.mxu0
    %v1030 = vadd.f32 %v905, %v1029
    %1031 = vmatprep.mubr.f32.mxu0 %v554
    %1032 = vmatmul.mubr.f32.gmra.mxu0 %v97
    %v1033 = vpop.f32.mrf.mxu0
    %v1034 = vadd.f32 %v909, %v1033
    %v1035 = vpop.f32.mrf.mxu0
    %v1036 = vadd.f32 %v911, %v1035
    %1037 = vmatprep.mubr.f32.mxu0 %v557
    %1038 = vmatmul.mubr.f32.gmra.mxu0 %v101
    %v1039 = vpop.f32.mrf.mxu0
    %v1040 = vadd.f32 %v915, %v1039
    %v1041 = vpop.f32.mrf.mxu0
    %v1042 = vadd.f32 %v917, %v1041
    %1043 = vmatprep.mubr.f32.mxu0 %v560
    %1044 = vmatmul.mubr.f32.gmra.mxu0 %v105
    %v1045 = vpop.f32.mrf.mxu0
    %v1046 = vadd.f32 %v921, %v1045
    %v1047 = vpop.f32.mrf.mxu0
    %v1048 = vadd.f32 %v923, %v1047
    %1049 = vmatprep.mubr.f32.mxu0 %v563
    %1050 = vmatmul.mubr.f32.gmra.mxu0 %v109
    %v1051 = vpop.f32.mrf.mxu0
    %v1052 = vadd.f32 %v927, %v1051
    %v1053 = vpop.f32.mrf.mxu0
    %v1054 = vadd.f32 %v929, %v1053
    %1055 = vmatprep.mubr.f32.mxu0 %v566
    %1056 = vmatmul.mubr.f32.gmra.mxu0 %v113
    %v1057 = vpop.f32.mrf.mxu0
    %v1058 = vadd.f32 %v933, %v1057
    %v1059 = vpop.f32.mrf.mxu0
    %v1060 = vadd.f32 %v935, %v1059
    %1061 = vmatprep.mubr.f32.mxu0 %v569
    %1062 = vmatmul.mubr.f32.gmra.mxu0 %v117
    %v1063 = vpop.f32.mrf.mxu0
    %v1064 = vadd.f32 %v939, %v1063
    %v1065 = vpop.f32.mrf.mxu0
    %v1066 = vadd.f32 %v941, %v1065
    %1067 = vmatprep.mubr.f32.mxu0 %v572
    %1068 = vmatmul.mubr.f32.gmra.mxu0 %v121
    %v1069 = vpop.f32.mrf.mxu0
    %v1070 = vadd.f32 %v945, %v1069
    %v1071 = vpop.f32.mrf.mxu0
    %v1072 = vadd.f32 %v947, %v1071
    %1073 = vdwg.mxu0
    %1074 = vmatprep.subr.mxu0 %v233
    %1075 = vmatpush1.msra.mxu0 %v232
    %1076 = vmatprep.subr.mxu0 %v226
    %1077 = vmatpush1.msra.mxu0 %v225
    %1078 = vmatprep.subr.mxu0 %v219
    %1079 = vmatpush1.msra.mxu0 %v218
    %1080 = vmatprep.subr.mxu0 %v212
    %1081 = vmatpush1.msra.mxu0 %v211
    %1082 = vmatprep.subr.mxu0 %v205
    %1083 = vmatpush1.msra.mxu0 %v204
    %1084 = vmatprep.subr.mxu0 %v198
    %1085 = vmatpush1.msra.mxu0 %v197
    %1086 = vmatprep.subr.mxu0 %v191
    %1087 = vmatpush1.msra.mxu0 %v190
    %1088 = vmatprep.subr.mxu0 %v184
    %1089 = vmatpush1.msra.mxu0 %v183
    %1090 = vmatprep.subr.mxu0 %v177
    %1091 = vmatpush1.msra.mxu0 %v176
    %1092 = vmatprep.subr.mxu0 %v170
    %1093 = vmatpush1.msra.mxu0 %v169
    %1094 = vmatprep.subr.mxu0 %v163
    %1095 = vmatpush1.msra.mxu0 %v162
    %1096 = vmatprep.subr.mxu0 %v156
    %1097 = vmatpush1.msra.mxu0 %v155
    %1098 = vmatprep.subr.mxu0 %v149
    %1099 = vmatpush1.msra.mxu0 %v148
    %1100 = vmatprep.subr.mxu0 %v142
    %1101 = vmatpush1.msra.mxu0 %v141
    %1102 = vmatprep.subr.mxu0 %v135
    %1103 = vmatpush1.msra.mxu0 %v134
    %1104 = vmatprep.subr.mxu0 %v128
    %1105 = vmatpush1.msra.mxu0 %v127
    %1106 = vmatprep.subr.mxu0 %v345
    %1107 = vmatpush2.msra.mxu0 %v344
    %1108 = vmatprep.subr.mxu0 %v338
    %1109 = vmatpush2.msra.mxu0 %v337
    %1110 = vmatprep.subr.mxu0 %v331
    %1111 = vmatpush2.msra.mxu0 %v330
    %1112 = vmatprep.subr.mxu0 %v324
    %1113 = vmatpush2.msra.mxu0 %v323
    %1114 = vmatprep.subr.mxu0 %v317
    %1115 = vmatpush2.msra.mxu0 %v316
    %1116 = vmatprep.subr.mxu0 %v310
    %1117 = vmatpush2.msra.mxu0 %v309
    %1118 = vmatprep.subr.mxu0 %v303
    %1119 = vmatpush2.msra.mxu0 %v302
    %1120 = vmatprep.subr.mxu0 %v296
    %1121 = vmatpush2.msra.mxu0 %v295
    %1122 = vmatprep.subr.mxu0 %v289
    %1123 = vmatpush2.msra.mxu0 %v288
    %1124 = vmatprep.subr.mxu0 %v282
    %1125 = vmatpush2.msra.mxu0 %v281
    %1126 = vmatprep.subr.mxu0 %v275
    %1127 = vmatpush2.msra.mxu0 %v274
    %1128 = vmatprep.subr.mxu0 %v268
    %1129 = vmatpush2.msra.mxu0 %v267
    %1130 = vmatprep.subr.mxu0 %v261
    %1131 = vmatpush2.msra.mxu0 %v260
    %1132 = vmatprep.subr.mxu0 %v254
    %1133 = vmatpush2.msra.mxu0 %v253
    %1134 = vmatprep.subr.mxu0 %v247
    %1135 = vmatpush2.msra.mxu0 %v246
    %1136 = vmatprep.subr.mxu0 %v240
    %1137 = vmatpush2.msra.mxu0 %v239
    %1138 = vmatprep.mubr.f32.mxu0 %v84
    %1139 = vmatmul.mubr.f32.gmra.mxu0 %v83
    %v1140 = vpop.f32.mrf.mxu0
    %v1141 = vadd.f32 0.0, %v1140
    %v1142 = vpop.f32.mrf.mxu0
    %v1143 = vadd.f32 0.0, %v1142
    %1144 = vmatprep.mubr.f32.mxu0 %v88
    %1145 = vmatmul.mubr.f32.gmra.mxu0 %v87
    %v1146 = vpop.f32.mrf.mxu0
    %v1147 = vadd.f32 0.0, %v1146
    %v1148 = vpop.f32.mrf.mxu0
    %v1149 = vadd.f32 0.0, %v1148
    %1150 = vmatprep.mubr.f32.mxu0 %v92
    %1151 = vmatmul.mubr.f32.gmra.mxu0 %v91
    %v1152 = vpop.f32.mrf.mxu0
    %v1153 = vadd.f32 0.0, %v1152
    %v1154 = vpop.f32.mrf.mxu0
    %v1155 = vadd.f32 0.0, %v1154
    %1156 = vmatprep.mubr.f32.mxu0 %v96
    %1157 = vmatmul.mubr.f32.gmra.mxu0 %v95
    %v1158 = vpop.f32.mrf.mxu0
    %v1159 = vadd.f32 0.0, %v1158
    %v1160 = vpop.f32.mrf.mxu0
    %v1161 = vadd.f32 0.0, %v1160
    %1162 = vmatprep.mubr.f32.mxu0 %v100
    %1163 = vmatmul.mubr.f32.gmra.mxu0 %v99
    %v1164 = vpop.f32.mrf.mxu0
    %v1165 = vadd.f32 0.0, %v1164
    %v1166 = vpop.f32.mrf.mxu0
    %v1167 = vadd.f32 0.0, %v1166
    %1168 = vmatprep.mubr.f32.mxu0 %v104
    %1169 = vmatmul.mubr.f32.gmra.mxu0 %v103
    %v1170 = vpop.f32.mrf.mxu0
    %v1171 = vadd.f32 0.0, %v1170
    %v1172 = vpop.f32.mrf.mxu0
    %v1173 = vadd.f32 0.0, %v1172
    %1174 = vmatprep.mubr.f32.mxu0 %v108
    %1175 = vmatmul.mubr.f32.gmra.mxu0 %v107
    %v1176 = vpop.f32.mrf.mxu0
    %v1177 = vadd.f32 0.0, %v1176
    %v1178 = vpop.f32.mrf.mxu0
    %v1179 = vadd.f32 0.0, %v1178
    %1180 = vmatprep.mubr.f32.mxu0 %v112
    %1181 = vmatmul.mubr.f32.gmra.mxu0 %v111
    %v1182 = vpop.f32.mrf.mxu0
    %v1183 = vadd.f32 0.0, %v1182
    %v1184 = vpop.f32.mrf.mxu0
    %v1185 = vadd.f32 0.0, %v1184
    %1186 = vmatprep.mubr.f32.mxu0 %v116
    %1187 = vmatmul.mubr.f32.gmra.mxu0 %v115
    %v1188 = vpop.f32.mrf.mxu0
    %v1189 = vadd.f32 0.0, %v1188
    %v1190 = vpop.f32.mrf.mxu0
    %v1191 = vadd.f32 0.0, %v1190
    %1192 = vmatprep.mubr.f32.mxu0 %v120
    %1193 = vmatmul.mubr.f32.gmra.mxu0 %v119
    %v1194 = vpop.f32.mrf.mxu0
    %v1195 = vadd.f32 0.0, %v1194
    %v1196 = vpop.f32.mrf.mxu0
    %v1197 = vadd.f32 0.0, %v1196
    %1198 = vdwg.mxu0
    %1199 = vmatprep.subr.mxu0 %v457
    %1200 = vmatpush1.msra.mxu0 %v456
    %1201 = vmatprep.subr.mxu0 %v450
    %1202 = vmatpush1.msra.mxu0 %v449
    %1203 = vmatprep.subr.mxu0 %v443
    %1204 = vmatpush1.msra.mxu0 %v442
    %1205 = vmatprep.subr.mxu0 %v436
    %1206 = vmatpush1.msra.mxu0 %v435
    %1207 = vmatprep.subr.mxu0 %v429
    %1208 = vmatpush1.msra.mxu0 %v428
    %1209 = vmatprep.subr.mxu0 %v422
    %1210 = vmatpush1.msra.mxu0 %v421
    %1211 = vmatprep.subr.mxu0 %v415
    %1212 = vmatpush1.msra.mxu0 %v414
    %1213 = vmatprep.subr.mxu0 %v408
    %1214 = vmatpush1.msra.mxu0 %v407
    %1215 = vmatprep.subr.mxu0 %v401
    %1216 = vmatpush1.msra.mxu0 %v400
    %1217 = vmatprep.subr.mxu0 %v394
    %1218 = vmatpush1.msra.mxu0 %v393
    %1219 = vmatprep.subr.mxu0 %v387
    %1220 = vmatpush1.msra.mxu0 %v386
    %1221 = vmatprep.subr.mxu0 %v380
    %1222 = vmatpush1.msra.mxu0 %v379
    %1223 = vmatprep.subr.mxu0 %v373
    %1224 = vmatpush1.msra.mxu0 %v372
    %1225 = vmatprep.subr.mxu0 %v366
    %1226 = vmatpush1.msra.mxu0 %v365
    %1227 = vmatprep.subr.mxu0 %v359
    %1228 = vmatpush1.msra.mxu0 %v358
    %1229 = vmatprep.subr.mxu0 %v352
    %1230 = vmatpush1.msra.mxu0 %v351
    %1231 = vmatprep.subr.mxu0 0.0
    %1232 = vmatpush2.msra.mxu0 0.0
    %1233 = vmatprep.subr.mxu0 0.0
    %1234 = vmatpush2.msra.mxu0 0.0
    %1235 = vmatprep.subr.mxu0 0.0
    %1236 = vmatpush2.msra.mxu0 0.0
    %1237 = vmatprep.subr.mxu0 0.0
    %1238 = vmatpush2.msra.mxu0 0.0
    %1239 = vmatprep.subr.mxu0 %v541
    %1240 = vmatpush2.msra.mxu0 %v540
    %1241 = vmatprep.subr.mxu0 %v534
    %1242 = vmatpush2.msra.mxu0 %v533
    %1243 = vmatprep.subr.mxu0 %v527
    %1244 = vmatpush2.msra.mxu0 %v526
    %1245 = vmatprep.subr.mxu0 %v520
    %1246 = vmatpush2.msra.mxu0 %v519
    %1247 = vmatprep.subr.mxu0 %v513
    %1248 = vmatpush2.msra.mxu0 %v512
    %1249 = vmatprep.subr.mxu0 %v506
    %1250 = vmatpush2.msra.mxu0 %v505
    %1251 = vmatprep.subr.mxu0 %v499
    %1252 = vmatpush2.msra.mxu0 %v498
    %1253 = vmatprep.subr.mxu0 %v492
    %1254 = vmatpush2.msra.mxu0 %v491
    %1255 = vmatprep.subr.mxu0 %v485
    %1256 = vmatpush2.msra.mxu0 %v484
    %1257 = vmatprep.subr.mxu0 %v478
    %1258 = vmatpush2.msra.mxu0 %v477
    %1259 = vmatprep.subr.mxu0 %v471
    %1260 = vmatpush2.msra.mxu0 %v470
    %1261 = vmatprep.subr.mxu0 %v464
    %1262 = vmatpush2.msra.mxu0 %v463
    %1263 = vmatprep.mubr.f32.mxu0 %v545
    %1264 = vmatmul.mubr.f32.gmra.mxu0 %v85
    %v1265 = vpop.f32.mrf.mxu0
    %v1266 = vadd.f32 %v1141, %v1265
    %v1267 = vpop.f32.mrf.mxu0
    %v1268 = vadd.f32 %v1143, %v1267
    %1269 = vmatprep.mubr.f32.mxu0 %v548
    %1270 = vmatmul.mubr.f32.gmra.mxu0 %v89
    %v1271 = vpop.f32.mrf.mxu0
    %v1272 = vadd.f32 %v1147, %v1271
    %v1273 = vpop.f32.mrf.mxu0
    %v1274 = vadd.f32 %v1149, %v1273
    %1275 = vmatprep.mubr.f32.mxu0 %v551
    %1276 = vmatmul.mubr.f32.gmra.mxu0 %v93
    %v1277 = vpop.f32.mrf.mxu0
    %v1278 = vadd.f32 %v1153, %v1277
    %v1279 = vpop.f32.mrf.mxu0
    %v1280 = vadd.f32 %v1155, %v1279
    %1281 = vmatprep.mubr.f32.mxu0 %v554
    %1282 = vmatmul.mubr.f32.gmra.mxu0 %v97
    %v1283 = vpop.f32.mrf.mxu0
    %v1284 = vadd.f32 %v1159, %v1283
    %v1285 = vpop.f32.mrf.mxu0
    %v1286 = vadd.f32 %v1161, %v1285
    %1287 = vmatprep.mubr.f32.mxu0 %v557
    %1288 = vmatmul.mubr.f32.gmra.mxu0 %v101
    %v1289 = vpop.f32.mrf.mxu0
    %v1290 = vadd.f32 %v1165, %v1289
    %v1291 = vpop.f32.mrf.mxu0
    %v1292 = vadd.f32 %v1167, %v1291
    %1293 = vmatprep.mubr.f32.mxu0 %v560
    %1294 = vmatmul.mubr.f32.gmra.mxu0 %v105
    %v1295 = vpop.f32.mrf.mxu0
    %v1296 = vadd.f32 %v1171, %v1295
    %v1297 = vpop.f32.mrf.mxu0
    %v1298 = vadd.f32 %v1173, %v1297
    %1299 = vmatprep.mubr.f32.mxu0 %v563
    %1300 = vmatmul.mubr.f32.gmra.mxu0 %v109
    %v1301 = vpop.f32.mrf.mxu0
    %v1302 = vadd.f32 %v1177, %v1301
    %v1303 = vpop.f32.mrf.mxu0
    %v1304 = vadd.f32 %v1179, %v1303
    %1305 = vmatprep.mubr.f32.mxu0 %v566
    %1306 = vmatmul.mubr.f32.gmra.mxu0 %v113
    %v1307 = vpop.f32.mrf.mxu0
    %v1308 = vadd.f32 %v1183, %v1307
    %v1309 = vpop.f32.mrf.mxu0
    %v1310 = vadd.f32 %v1185, %v1309
    %1311 = vmatprep.mubr.f32.mxu0 %v569
    %1312 = vmatmul.mubr.f32.gmra.mxu0 %v117
    %v1313 = vpop.f32.mrf.mxu0
    %v1314 = vadd.f32 %v1189, %v1313
    %v1315 = vpop.f32.mrf.mxu0
    %v1316 = vadd.f32 %v1191, %v1315
    %1317 = vmatprep.mubr.f32.mxu0 %v572
    %1318 = vmatmul.mubr.f32.gmra.mxu0 %v121
    %v1319 = vpop.f32.mrf.mxu0
    %v1320 = vadd.f32 %v1195, %v1319
    %v1321 = vpop.f32.mrf.mxu0
    %v1322 = vadd.f32 %v1197, %v1321
    %1323 = vdwg.mxu0
    %1324 = vmatprep.subr.mxu0 0.0
    %1325 = vmatpush1.msra.mxu0 %v234
    %1326 = vmatprep.subr.mxu0 0.0
    %1327 = vmatpush1.msra.mxu0 %v227
    %1328 = vmatprep.subr.mxu0 0.0
    %1329 = vmatpush1.msra.mxu0 %v220
    %1330 = vmatprep.subr.mxu0 0.0
    %1331 = vmatpush1.msra.mxu0 %v213
    %1332 = vmatprep.subr.mxu0 0.0
    %1333 = vmatpush1.msra.mxu0 %v206
    %1334 = vmatprep.subr.mxu0 0.0
    %1335 = vmatpush1.msra.mxu0 %v199
    %1336 = vmatprep.subr.mxu0 0.0
    %1337 = vmatpush1.msra.mxu0 %v192
    %1338 = vmatprep.subr.mxu0 0.0
    %1339 = vmatpush1.msra.mxu0 %v185
    %1340 = vmatprep.subr.mxu0 0.0
    %1341 = vmatpush1.msra.mxu0 %v178
    %1342 = vmatprep.subr.mxu0 0.0
    %1343 = vmatpush1.msra.mxu0 %v171
    %1344 = vmatprep.subr.mxu0 0.0
    %1345 = vmatpush1.msra.mxu0 %v164
    %1346 = vmatprep.subr.mxu0 0.0
    %1347 = vmatpush1.msra.mxu0 %v157
    %1348 = vmatprep.subr.mxu0 0.0
    %1349 = vmatpush1.msra.mxu0 %v150
    %1350 = vmatprep.subr.mxu0 0.0
    %1351 = vmatpush1.msra.mxu0 %v143
    %1352 = vmatprep.subr.mxu0 0.0
    %1353 = vmatpush1.msra.mxu0 %v136
    %1354 = vmatprep.subr.mxu0 0.0
    %1355 = vmatpush1.msra.mxu0 %v129
    %1356 = vmatprep.subr.mxu0 0.0
    %1357 = vmatpush2.msra.mxu0 %v346
    %1358 = vmatprep.subr.mxu0 0.0
    %1359 = vmatpush2.msra.mxu0 %v339
    %1360 = vmatprep.subr.mxu0 0.0
    %1361 = vmatpush2.msra.mxu0 %v332
    %1362 = vmatprep.subr.mxu0 0.0
    %1363 = vmatpush2.msra.mxu0 %v325
    %1364 = vmatprep.subr.mxu0 0.0
    %1365 = vmatpush2.msra.mxu0 %v318
    %1366 = vmatprep.subr.mxu0 0.0
    %1367 = vmatpush2.msra.mxu0 %v311
    %1368 = vmatprep.subr.mxu0 0.0
    %1369 = vmatpush2.msra.mxu0 %v304
    %1370 = vmatprep.subr.mxu0 0.0
    %1371 = vmatpush2.msra.mxu0 %v297
    %1372 = vmatprep.subr.mxu0 0.0
    %1373 = vmatpush2.msra.mxu0 %v290
    %1374 = vmatprep.subr.mxu0 0.0
    %1375 = vmatpush2.msra.mxu0 %v283
    %1376 = vmatprep.subr.mxu0 0.0
    %1377 = vmatpush2.msra.mxu0 %v276
    %1378 = vmatprep.subr.mxu0 0.0
    %1379 = vmatpush2.msra.mxu0 %v269
    %1380 = vmatprep.subr.mxu0 0.0
    %1381 = vmatpush2.msra.mxu0 %v262
    %1382 = vmatprep.subr.mxu0 0.0
    %1383 = vmatpush2.msra.mxu0 %v255
    %1384 = vmatprep.subr.mxu0 0.0
    %1385 = vmatpush2.msra.mxu0 %v248
    %1386 = vmatprep.subr.mxu0 0.0
    %1387 = vmatpush2.msra.mxu0 %v241
    %1388 = vmatprep.mubr.f32.mxu0 %v84
    %1389 = vmatmul.mubr.f32.gmra.mxu0 %v83
    %v1390 = vpop.f32.mrf.mxu0
    %v1391 = vadd.f32 0.0, %v1390
    %v1392 = vpop.f32.mrf.mxu0
    %1393 = vmatprep.mubr.f32.mxu0 %v88
    %1394 = vmatmul.mubr.f32.gmra.mxu0 %v87
    %v1395 = vpop.f32.mrf.mxu0
    %v1396 = vadd.f32 0.0, %v1395
    %v1397 = vpop.f32.mrf.mxu0
    %1398 = vmatprep.mubr.f32.mxu0 %v92
    %1399 = vmatmul.mubr.f32.gmra.mxu0 %v91
    %v1400 = vpop.f32.mrf.mxu0
    %v1401 = vadd.f32 0.0, %v1400
    %v1402 = vpop.f32.mrf.mxu0
    %1403 = vmatprep.mubr.f32.mxu0 %v96
    %1404 = vmatmul.mubr.f32.gmra.mxu0 %v95
    %v1405 = vpop.f32.mrf.mxu0
    %v1406 = vadd.f32 0.0, %v1405
    %v1407 = vpop.f32.mrf.mxu0
    %1408 = vmatprep.mubr.f32.mxu0 %v100
    %1409 = vmatmul.mubr.f32.gmra.mxu0 %v99
    %v1410 = vpop.f32.mrf.mxu0
    %v1411 = vadd.f32 0.0, %v1410
    %v1412 = vpop.f32.mrf.mxu0
    %1413 = vmatprep.mubr.f32.mxu0 %v104
    %1414 = vmatmul.mubr.f32.gmra.mxu0 %v103
    %v1415 = vpop.f32.mrf.mxu0
    %v1416 = vadd.f32 0.0, %v1415
    %v1417 = vpop.f32.mrf.mxu0
    %1418 = vmatprep.mubr.f32.mxu0 %v108
    %1419 = vmatmul.mubr.f32.gmra.mxu0 %v107
    %v1420 = vpop.f32.mrf.mxu0
    %v1421 = vadd.f32 0.0, %v1420
    %v1422 = vpop.f32.mrf.mxu0
    %1423 = vmatprep.mubr.f32.mxu0 %v112
    %1424 = vmatmul.mubr.f32.gmra.mxu0 %v111
    %v1425 = vpop.f32.mrf.mxu0
    %v1426 = vadd.f32 0.0, %v1425
    %v1427 = vpop.f32.mrf.mxu0
    %1428 = vmatprep.mubr.f32.mxu0 %v116
    %1429 = vmatmul.mubr.f32.gmra.mxu0 %v115
    %v1430 = vpop.f32.mrf.mxu0
    %v1431 = vadd.f32 0.0, %v1430
    %v1432 = vpop.f32.mrf.mxu0
    %1433 = vmatprep.mubr.f32.mxu0 %v120
    %1434 = vmatmul.mubr.f32.gmra.mxu0 %v119
    %v1435 = vpop.f32.mrf.mxu0
    %v1436 = vadd.f32 0.0, %v1435
    %v1437 = vpop.f32.mrf.mxu0
    %1438 = vdwg.mxu0
    %1439 = vmatprep.subr.mxu0 0.0
    %1440 = vmatpush1.msra.mxu0 %v458
    %1441 = vmatprep.subr.mxu0 0.0
    %1442 = vmatpush1.msra.mxu0 %v451
    %1443 = vmatprep.subr.mxu0 0.0
    %1444 = vmatpush1.msra.mxu0 %v444
    %1445 = vmatprep.subr.mxu0 0.0
    %1446 = vmatpush1.msra.mxu0 %v437
    %1447 = vmatprep.subr.mxu0 0.0
    %1448 = vmatpush1.msra.mxu0 %v430
    %1449 = vmatprep.subr.mxu0 0.0
    %1450 = vmatpush1.msra.mxu0 %v423
    %1451 = vmatprep.subr.mxu0 0.0
    %1452 = vmatpush1.msra.mxu0 %v416
    %1453 = vmatprep.subr.mxu0 0.0
    %1454 = vmatpush1.msra.mxu0 %v409
    %1455 = vmatprep.subr.mxu0 0.0
    %1456 = vmatpush1.msra.mxu0 %v402
    %1457 = vmatprep.subr.mxu0 0.0
    %1458 = vmatpush1.msra.mxu0 %v395
    %1459 = vmatprep.subr.mxu0 0.0
    %1460 = vmatpush1.msra.mxu0 %v388
    %1461 = vmatprep.subr.mxu0 0.0
    %1462 = vmatpush1.msra.mxu0 %v381
    %1463 = vmatprep.subr.mxu0 0.0
    %1464 = vmatpush1.msra.mxu0 %v374
    %1465 = vmatprep.subr.mxu0 0.0
    %1466 = vmatpush1.msra.mxu0 %v367
    %1467 = vmatprep.subr.mxu0 0.0
    %1468 = vmatpush1.msra.mxu0 %v360
    %1469 = vmatprep.subr.mxu0 0.0
    %1470 = vmatpush1.msra.mxu0 %v353
    %1471 = vmatprep.subr.mxu0 0.0
    %1472 = vmatpush2.msra.mxu0 0.0
    %1473 = vmatprep.subr.mxu0 0.0
    %1474 = vmatpush2.msra.mxu0 0.0
    %1475 = vmatprep.subr.mxu0 0.0
    %1476 = vmatpush2.msra.mxu0 0.0
    %1477 = vmatprep.subr.mxu0 0.0
    %1478 = vmatpush2.msra.mxu0 0.0
    %1479 = vmatprep.subr.mxu0 0.0
    %1480 = vmatpush2.msra.mxu0 %v542
    %1481 = vmatprep.subr.mxu0 0.0
    %1482 = vmatpush2.msra.mxu0 %v535
    %1483 = vmatprep.subr.mxu0 0.0
    %1484 = vmatpush2.msra.mxu0 %v528
    %1485 = vmatprep.subr.mxu0 0.0
    %1486 = vmatpush2.msra.mxu0 %v521
    %1487 = vmatprep.subr.mxu0 0.0
    %1488 = vmatpush2.msra.mxu0 %v514
    %1489 = vmatprep.subr.mxu0 0.0
    %1490 = vmatpush2.msra.mxu0 %v507
    %1491 = vmatprep.subr.mxu0 0.0
    %1492 = vmatpush2.msra.mxu0 %v500
    %1493 = vmatprep.subr.mxu0 0.0
    %1494 = vmatpush2.msra.mxu0 %v493
    %1495 = vmatprep.subr.mxu0 0.0
    %1496 = vmatpush2.msra.mxu0 %v486
    %1497 = vmatprep.subr.mxu0 0.0
    %1498 = vmatpush2.msra.mxu0 %v479
    %1499 = vmatprep.subr.mxu0 0.0
    %1500 = vmatpush2.msra.mxu0 %v472
    %1501 = vmatprep.subr.mxu0 0.0
    %1502 = vmatpush2.msra.mxu0 %v465
    %1503 = vmatprep.mubr.f32.mxu0 %v545
    %1504 = vmatmul.mubr.f32.gmra.mxu0 %v85
    %v1505 = vpop.f32.mrf.mxu0
    %v1506 = vadd.f32 %v1391, %v1505
    %v1507 = vpop.f32.mrf.mxu0
    %1508 = vmatprep.mubr.f32.mxu0 %v548
    %1509 = vmatmul.mubr.f32.gmra.mxu0 %v89
    %v1510 = vpop.f32.mrf.mxu0
    %v1511 = vadd.f32 %v1396, %v1510
    %v1512 = vpop.f32.mrf.mxu0
    %1513 = vmatprep.mubr.f32.mxu0 %v551
    %1514 = vmatmul.mubr.f32.gmra.mxu0 %v93
    %v1515 = vpop.f32.mrf.mxu0
    %v1516 = vadd.f32 %v1401, %v1515
    %v1517 = vpop.f32.mrf.mxu0
    %1518 = vmatprep.mubr.f32.mxu0 %v554
    %1519 = vmatmul.mubr.f32.gmra.mxu0 %v97
    %v1520 = vpop.f32.mrf.mxu0
    %v1521 = vadd.f32 %v1406, %v1520
    %v1522 = vpop.f32.mrf.mxu0
    %1523 = vmatprep.mubr.f32.mxu0 %v557
    %1524 = vmatmul.mubr.f32.gmra.mxu0 %v101
    %v1525 = vpop.f32.mrf.mxu0
    %v1526 = vadd.f32 %v1411, %v1525
    %v1527 = vpop.f32.mrf.mxu0
    %1528 = vmatprep.mubr.f32.mxu0 %v560
    %1529 = vmatmul.mubr.f32.gmra.mxu0 %v105
    %v1530 = vpop.f32.mrf.mxu0
    %v1531 = vadd.f32 %v1416, %v1530
    %v1532 = vpop.f32.mrf.mxu0
    %1533 = vmatprep.mubr.f32.mxu0 %v563
    %1534 = vmatmul.mubr.f32.gmra.mxu0 %v109
    %v1535 = vpop.f32.mrf.mxu0
    %v1536 = vadd.f32 %v1421, %v1535
    %v1537 = vpop.f32.mrf.mxu0
    %1538 = vmatprep.mubr.f32.mxu0 %v566
    %1539 = vmatmul.mubr.f32.gmra.mxu0 %v113
    %v1540 = vpop.f32.mrf.mxu0
    %v1541 = vadd.f32 %v1426, %v1540
    %v1542 = vpop.f32.mrf.mxu0
    %1543 = vmatprep.mubr.f32.mxu0 %v569
    %1544 = vmatmul.mubr.f32.gmra.mxu0 %v117
    %v1545 = vpop.f32.mrf.mxu0
    %v1546 = vadd.f32 %v1431, %v1545
    %v1547 = vpop.f32.mrf.mxu0
    %1548 = vmatprep.mubr.f32.mxu0 %v572
    %1549 = vmatmul.mubr.f32.gmra.mxu0 %v121
    %v1550 = vpop.f32.mrf.mxu0
    %v1551 = vadd.f32 %v1436, %v1550
    %v1552 = vpop.f32.mrf.mxu0
    %1553 = vdwg.mxu0
    %1554 = vst [vmem:[#allocation2] sm:$0xff] %v766
    %1555 = vst [vmem:[#allocation2 + $0x8] sm:$0xff] %v768
    %1556 = vst [vmem:[#allocation2 + $0x10] sm:$0xff] %v1016
    %1557 = vst [vmem:[#allocation2 + $0x18] sm:$0xff] %v1018
    %1558 = vst [vmem:[#allocation2 + $0x20] sm:$0xff] %v1266
    %1559 = vst [vmem:[#allocation2 + $0x28] sm:$0xff] %v1268
    %vm1560 = vcmask 130048
    %1561 = vst.msk [vmem:[#allocation2 + $0x30] sm:$0xff] %vm1560, %v1506
    %1562 = vst [vmem:[#allocation2 + $0x38] sm:$0xff] %v772
    %1563 = vst [vmem:[#allocation2 + $0x40] sm:$0xff] %v774
    %1564 = vst [vmem:[#allocation2 + $0x48] sm:$0xff] %v1022
    %1565 = vst [vmem:[#allocation2 + $0x50] sm:$0xff] %v1024
    %1566 = vst [vmem:[#allocation2 + $0x58] sm:$0xff] %v1272
    %1567 = vst [vmem:[#allocation2 + $0x60] sm:$0xff] %v1274
    %1568 = vst.msk [vmem:[#allocation2 + $0x68] sm:$0xff] %vm1560, %v1511
    %1569 = vst [vmem:[#allocation2 + $0x70] sm:$0xff] %v778
    %1570 = vst [vmem:[#allocation2 + $0x78] sm:$0xff] %v780
    %1571 = vst [vmem:[#allocation2 + $0x80] sm:$0xff] %v1028
    %1572 = vst [vmem:[#allocation2 + $0x88] sm:$0xff] %v1030
    %1573 = vst [vmem:[#allocation2 + $0x90] sm:$0xff] %v1278
    %1574 = vst [vmem:[#allocation2 + $0x98] sm:$0xff] %v1280
    %1575 = vst.msk [vmem:[#allocation2 + $0xa0] sm:$0xff] %vm1560, %v1516
    %1576 = vst [vmem:[#allocation2 + $0xa8] sm:$0xff] %v784
    %1577 = vst [vmem:[#allocation2 + $0xb0] sm:$0xff] %v786
    %1578 = vst [vmem:[#allocation2 + $0xb8] sm:$0xff] %v1034
    %1579 = vst [vmem:[#allocation2 + $0xc0] sm:$0xff] %v1036
    %1580 = vst [vmem:[#allocation2 + $0xc8] sm:$0xff] %v1284
    %1581 = vst [vmem:[#allocation2 + $0xd0] sm:$0xff] %v1286
    %1582 = vst.msk [vmem:[#allocation2 + $0xd8] sm:$0xff] %vm1560, %v1521
    %1583 = vst [vmem:[#allocation2 + $0xe0] sm:$0xff] %v790
    %1584 = vst [vmem:[#allocation2 + $0xe8] sm:$0xff] %v792
    %1585 = vst [vmem:[#allocation2 + $0xf0] sm:$0xff] %v1040
    %1586 = vst [vmem:[#allocation2 + $0xf8] sm:$0xff] %v1042
    %1587 = vst [vmem:[#allocation2 + $0x100] sm:$0xff] %v1290
    %1588 = vst [vmem:[#allocation2 + $0x108] sm:$0xff] %v1292
    %1589 = vst.msk [vmem:[#allocation2 + $0x110] sm:$0xff] %vm1560, %v1526
    %1590 = vst [vmem:[#allocation2 + $0x118] sm:$0xff] %v796
    %1591 = vst [vmem:[#allocation2 + $0x120] sm:$0xff] %v798
    %1592 = vst [vmem:[#allocation2 + $0x128] sm:$0xff] %v1046
    %1593 = vst [vmem:[#allocation2 + $0x130] sm:$0xff] %v1048
    %1594 = vst [vmem:[#allocation2 + $0x138] sm:$0xff] %v1296
    %1595 = vst [vmem:[#allocation2 + $0x140] sm:$0xff] %v1298
    %1596 = vst.msk [vmem:[#allocation2 + $0x148] sm:$0xff] %vm1560, %v1531
    %1597 = vst [vmem:[#allocation2 + $0x150] sm:$0xff] %v802
    %1598 = vst [vmem:[#allocation2 + $0x158] sm:$0xff] %v804
    %1599 = vst [vmem:[#allocation2 + $0x160] sm:$0xff] %v1052
    %1600 = vst [vmem:[#allocation2 + $0x168] sm:$0xff] %v1054
    %1601 = vst [vmem:[#allocation2 + $0x170] sm:$0xff] %v1302
    %1602 = vst [vmem:[#allocation2 + $0x178] sm:$0xff] %v1304
    %1603 = vst.msk [vmem:[#allocation2 + $0x180] sm:$0xff] %vm1560, %v1536
    %1604 = vst [vmem:[#allocation2 + $0x188] sm:$0xff] %v808
    %1605 = vst [vmem:[#allocation2 + $0x190] sm:$0xff] %v810
    %1606 = vst [vmem:[#allocation2 + $0x198] sm:$0xff] %v1058
    %1607 = vst [vmem:[#allocation2 + $0x1a0] sm:$0xff] %v1060
    %1608 = vst [vmem:[#allocation2 + $0x1a8] sm:$0xff] %v1308
    %1609 = vst [vmem:[#allocation2 + $0x1b0] sm:$0xff] %v1310
    %1610 = vst.msk [vmem:[#allocation2 + $0x1b8] sm:$0xff] %vm1560, %v1541
    %1611 = vst [vmem:[#allocation2 + $0x1c0] sm:$0xff] %v814
    %1612 = vst [vmem:[#allocation2 + $0x1c8] sm:$0xff] %v816
    %1613 = vst [vmem:[#allocation2 + $0x1d0] sm:$0xff] %v1064
    %1614 = vst [vmem:[#allocation2 + $0x1d8] sm:$0xff] %v1066
    %1615 = vst [vmem:[#allocation2 + $0x1e0] sm:$0xff] %v1314
    %1616 = vst [vmem:[#allocation2 + $0x1e8] sm:$0xff] %v1316
    %1617 = vst.msk [vmem:[#allocation2 + $0x1f0] sm:$0xff] %vm1560, %v1546
    %1618 = vst [vmem:[#allocation2 + $0x1f8] sm:$0xff] %v820
    %1619 = vst [vmem:[#allocation2 + $0x200] sm:$0xff] %v822
    %1620 = vst [vmem:[#allocation2 + $0x208] sm:$0xff] %v1070
    %1621 = vst [vmem:[#allocation2 + $0x210] sm:$0xff] %v1072
    %1622 = vst [vmem:[#allocation2 + $0x218] sm:$0xff] %v1320
    %1623 = vst [vmem:[#allocation2 + $0x220] sm:$0xff] %v1322
    %1624 = vst.msk [vmem:[#allocation2 + $0x228] sm:$0xff] %vm1560, %v1551
    // Predicated region
    $region14: #{tpu_custom_call.1} parent=1 // pred_check
      _
    $region15: #{tpu_custom_call.1} parent=1 // pred_check_branch
      %1626 = sbr.rel (0) target = $region17
    $region16: #{tpu_custom_call.1} parent=1 // pred_region
      %s1628 = ssub.s32 8960, 8960
      %1629 = vsyncadd [#allocation3], %s1628
      %s1630 = sshll.u32 [#allocation2], 4
      %s1631 = int_to_ptr.vmem [resolvable:$true] %s1630
      %1636 = dma.vmem_to_hbm [thread:$0]  %s1631, 8960, %s3, [#allocation3], 896, 896, 56
    $region17: #{tpu_custom_call.1} parent=1 // pred_fallthru
      _
    // Predicated region
    $region18: #{tpu_custom_call.1} parent=1 // pred_check
      _
    $region19: #{tpu_custom_call.1} parent=1 // pred_check_branch
      %1638 = sbr.rel (0) target = $region21
    $region20: #{tpu_custom_call.1} parent=1 // pred_region
      %1639 = dma.done [#allocation3], 8960
    $region21: #{tpu_custom_call.1} parent=1 // pred_fallthru
      _
    %1640 = vsyncpa [#allocation3], 1

</llo_original>
